<compile_context>
chip_gen: v7x
topology: tpu7x:2x2x1
jax: 0.10.0
libtpu: 0.0.40
codegen_flags: <defaults>
</compile_context>

<pallas_src>
import math

import jax
import jax.numpy as jnp
from jax.experimental import pallas as pl
from jax.experimental.pallas import tpu as pltpu

# ----------------- synthetic hparams (small) -----------------
VOCAB = 100
PAD_IDX = 1                  # self._pad_idx / hparams.pad_idx
H = 32                       # hparams.bert_hidden_dim
N_HEADS = 4
D_HEAD = H // N_HEADS
FFN = 64
N_LAYERS = 2
MAX_POS = 64
N_CLASSES = 3                # len(hparams.output_classes)
LN_EPS = 1e-5


# ----------------- in-kernel helpers -----------------
def _layer_norm(x, g, b):
    mu = jnp.mean(x, axis=-1, keepdims=True)
    var = jnp.mean(jnp.square(x - mu), axis=-1, keepdims=True)
    return (x - mu) * jax.lax.rsqrt(var + LN_EPS) * g + b


def _gelu_tanh(x):
    # TODO(synk): reference RoBERTa uses exact erf-based GELU; tanh approximation
    # used here (EUP-friendly, avoids relying on an in-kernel erf lowering).
    c = math.sqrt(2.0 / math.pi)
    return 0.5 * x * (1.0 + jnp.tanh(c * (x + 0.044715 * x * x * x)))


# ----------------- fused encoder + classification-head kernel -----------------
def _encoder_kernel(x0_ref, bias_ref, embg_ref, embb_ref,
                    wqkv_ref, bqkv_ref, wo_ref, bo_ref,
                    ln1g_ref, ln1b_ref, w1_ref, b1_ref,
                    w2_ref, b2_ref, ln2g_ref, ln2b_ref,
                    cw1_ref, cb1_ref, cw2_ref, cb2_ref,
                    logits_ref, x_sc):
    l = pl.program_id(1)

    @pl.when(l == 0)
    def _():
        # embedding LayerNorm fused into the first layer step of this sequence
        x_sc[...] = _layer_norm(x0_ref[0], embg_ref[...], embb_ref[...])

    x = x_sc[...]                                            # (S, H) f32 in VMEM

    # ---- fused QKV projection (bf16 operands, f32 accumulation) ----
    qkv = jnp.dot(x.astype(jnp.bfloat16), wqkv_ref[0],
                  preferred_element_type=jnp.float32) + bqkv_ref[0]   # (S, 3H)
    q = qkv[:, 0:H]                       # 1/sqrt(d_head) already folded into wqkv
    k = qkv[:, H:2 * H]
    v = qkv[:, 2 * H:3 * H]

    # ---- multi-head self-attention: heads stacked on a leading batch axis ----
    qh = jnp.stack([q[:, h * D_HEAD:(h + 1) * D_HEAD] for h in range(N_HEADS)], axis=0)
    kh = jnp.stack([k[:, h * D_HEAD:(h + 1) * D_HEAD] for h in range(N_HEADS)], axis=0)
    vh = jnp.stack([v[:, h * D_HEAD:(h + 1) * D_HEAD] for h in range(N_HEADS)], axis=0)
    s = jnp.einsum("hqd,hkd->hqk", qh.astype(jnp.bfloat16), kh.astype(jnp.bfloat16),
                   preferred_element_type=jnp.float32)                 # (NH, S, S)
    s = s + bias_ref[...]                                    # (1,1,S) key-pad bias
    s = s - jnp.max(s, axis=-1, keepdims=True)               # one softmax, all heads
    p = jnp.exp(s)
    p = p * pl.reciprocal(jnp.sum(p, axis=-1, keepdims=True))          # exact recip
    ctx_h = jnp.einsum("hqk,hkd->hqd", p.astype(jnp.bfloat16), vh.astype(jnp.bfloat16),
                       preferred_element_type=jnp.float32)             # (NH, S, DH)
    ctx = jnp.concatenate([ctx_h[h] for h in range(N_HEADS)], axis=-1)  # (S, H)

    # ---- output projection + residual + LayerNorm ----
    attn_out = jnp.dot(ctx.astype(jnp.bfloat16), wo_ref[0],
                       preferred_element_type=jnp.float32) + bo_ref[0]
    x = _layer_norm(x + attn_out, ln1g_ref[0], ln1b_ref[0])

    # ---- FFN (GELU) + residual + LayerNorm ----
    h1 = _gelu_tanh(jnp.dot(x.astype(jnp.bfloat16), w1_ref[0],
                            preferred_element_type=jnp.float32) + b1_ref[0])
    ffn = jnp.dot(h1.astype(jnp.bfloat16), w2_ref[0],
                  preferred_element_type=jnp.float32) + b2_ref[0]
    x = _layer_norm(x + ffn, ln2g_ref[0], ln2b_ref[0])
    x_sc[...] = x                                            # carry to next layer step

    @pl.when(l == pl.num_programs(1) - 1)
    def _():
        # classification head fused into the last layer step.
        # TODO(synk): nn.Dropout layers are identity here (eval-mode semantics).
        hc = jnp.tanh(jnp.dot(x, cw1_ref[...], preferred_element_type=jnp.float32)
                      + cb1_ref[...])
        logits_ref[0] = (jnp.dot(hc, cw2_ref[...], preferred_element_type=jnp.float32)
                         + cb2_ref[...]).astype(logits_ref.dtype)


def _layer_spec(arr):
    # one layer's slab of a weight stacked along a leading N_LAYERS axis
    return pl.BlockSpec((1,) + arr.shape[1:], lambda b, l: (l, 0, 0))


def _const_spec(arr):
    nd = arr.ndim
    return pl.BlockSpec(arr.shape, lambda b, l: (0,) * nd)


def roberta_body(x0, attn_bias, params):
    """All encoder layers + classification head in a single pallas_call."""
    B, S, _ = x0.shape
    layer_names = ("wqkv", "bqkv", "wo", "bo", "ln1_g", "ln1_b",
                   "w1", "b1", "w2", "b2", "ln2_g", "ln2_b")
    operands = ([x0, attn_bias, params["emb_ln_g"], params["emb_ln_b"]]
                + [params[n] for n in layer_names]
                + [params["cls_w1"], params["cls_b1"],
                   params["cls_w2"], params["cls_b2"]])
    in_specs = ([pl.BlockSpec((1, S, H), lambda b, l: (b, 0, 0)),
                 pl.BlockSpec((1, 1, S), lambda b, l: (b, 0, 0)),
                 _const_spec(params["emb_ln_g"]), _const_spec(params["emb_ln_b"])]
                + [_layer_spec(params[n]) for n in layer_names]
                + [_const_spec(params["cls_w1"]), _const_spec(params["cls_b1"]),
                   _const_spec(params["cls_w2"]), _const_spec(params["cls_b2"])])
    return pl.pallas_call(
        _encoder_kernel,
        out_shape=jax.ShapeDtypeStruct((B, S, N_CLASSES), jnp.float32),
        grid=(B, N_LAYERS),
        in_specs=in_specs,
        out_specs=pl.BlockSpec((1, S, N_CLASSES), lambda b, l: (b, 0, 0)),
        scratch_shapes=[pltpu.VMEM((S, H), jnp.float32)],   # activation carry
        compiler_params=pltpu.CompilerParams(
            dimension_semantics=("parallel", "arbitrary")),
    )(*operands)


# ----------------- parameters -----------------
def init_params(key):
    def norm(k, shape, scale=0.02):
        return scale * jax.random.normal(k, shape, dtype=jnp.float32)

    k = jax.random.split(key, 16)
    wqkv = norm(k[3], (N_LAYERS, H, 3 * H))
    bqkv = jnp.zeros((N_LAYERS, 1, 3 * H), jnp.float32)
    # fold 1/sqrt(d_head) into the Q projection (weight + bias) at init time
    attn_scale = 1.0 / math.sqrt(D_HEAD)
    wqkv = wqkv.at[:, :, :H].multiply(attn_scale)
    bqkv = bqkv.at[:, :, :H].multiply(attn_scale)
    return {
        "word_emb": norm(k[0], (VOCAB, H)),
        "pos_emb": norm(k[1], (MAX_POS, H)),
        "type_emb": norm(k[2], (1, H)),          # token_type_ids are all zero
        "emb_ln_g": jnp.ones((1, H), jnp.float32),
        "emb_ln_b": jnp.zeros((1, H), jnp.float32),
        # per-layer weights stacked on a leading N_LAYERS axis; matmul weights bf16
        "wqkv": wqkv.astype(jnp.bfloat16),
        "bqkv": bqkv,
        "wo": norm(k[4], (N_LAYERS, H, H)).astype(jnp.bfloat16),
        "bo": jnp.zeros((N_LAYERS, 1, H), jnp.float32),
        "ln1_g": jnp.ones((N_LAYERS, 1, H), jnp.float32),
        "ln1_b": jnp.zeros((N_LAYERS, 1, H), jnp.float32),
        "w1": norm(k[5], (N_LAYERS, H, FFN)).astype(jnp.bfloat16),
        "b1": jnp.zeros((N_LAYERS, 1, FFN), jnp.float32),
        "w2": norm(k[6], (N_LAYERS, FFN, H)).astype(jnp.bfloat16),
        "b2": jnp.zeros((N_LAYERS, 1, H), jnp.float32),
        "ln2_g": jnp.ones((N_LAYERS, 1, H), jnp.float32),
        "ln2_b": jnp.zeros((N_LAYERS, 1, H), jnp.float32),
        "cls_w1": norm(k[7], (H, H // 2)),
        "cls_b1": jnp.zeros((1, H // 2), jnp.float32),
        "cls_w2": norm(k[8], (H // 2, N_CLASSES)),
        "cls_b2": jnp.zeros((1, N_CLASSES), jnp.float32),
    }


# ----------------- model glue -----------------
def roberta_embed(input_ids, params):
    B, S = input_ids.shape
    assert S + PAD_IDX < MAX_POS, "position ids would exceed MAX_POS"
    mask = (input_ids != PAD_IDX).astype(jnp.int32)
    # RoBERTa-style position ids (offset by pad_idx, pads get pad_idx)
    position_ids = jnp.cumsum(mask, axis=1) * mask + PAD_IDX
    word = jnp.take(params["word_emb"], input_ids, axis=0)       # (B,S,H)
    pos = jnp.take(params["pos_emb"], position_ids, axis=0)      # (B,S,H)
    tok = params["type_emb"][0]                                  # (H,)
    x0 = word + pos + tok                                        # (B,S,H)
    # additive key-padding bias so pad tokens are masked out of self-attention
    attn_bias = jnp.where(input_ids != PAD_IDX, 0.0, -1e9).astype(jnp.float32)
    return x0, attn_bias[:, None, :]                             # (B,1,S)


def roberta_encoder_forward(params, batch_sequence, sequence_lengths, batch_label):
    """Mirrors RobertaEncoder.forward: returns (logits, labels)."""
    B, S = batch_sequence.shape
    x0, attn_bias = roberta_embed(batch_sequence, params)        # (B,S,H), (B,1,S)
    logits_all = roberta_body(x0, attn_bias, params)             # (B,S,C)
    logits_all = logits_all.reshape(B * S, N_CLASSES)

    # get_mask(batch_sequence, sequence_lengths, pad_idx): 1 for real tokens
    seq_mask = (jnp.arange(S)[None, :] < sequence_lengths[:, None]).reshape(-1)
    valid_idx = jnp.nonzero(seq_mask)[0]                         # eager only (dynamic shape)

    logits = logits_all[valid_idx, :]                            # (N_valid, C)
    labels = batch_label.reshape(-1)[valid_idx] - 1              # (N_valid,)
    return logits, labels


# ----------------- main -----------------
if __name__ == "__main__":
    root = jax.random.PRNGKey(0)
    k_params, k_tok, k_lab = jax.random.split(root, 3)

    params = init_params(k_params)

    B, S = 2, 8
    sequence_lengths = jnp.array([6, 5], dtype=jnp.int32)
    tok = jax.random.randint(k_tok, (B, S), 3, VOCAB, dtype=jnp.int32)
    posn = jnp.arange(S)[None, :]
    batch_sequence = jnp.where(posn < sequence_lengths[:, None], tok, PAD_IDX)
    batch_label = jax.random.randint(k_lab, (B, S), 1, N_CLASSES + 1, dtype=jnp.int32)

    logits, labels = roberta_encoder_forward(
        params, batch_sequence, sequence_lengths, batch_label)
    jax.block_until_ready((logits, labels))

    assert logits.shape == (int(sequence_lengths.sum()), N_CLASSES)
    assert labels.shape == (int(sequence_lengths.sum()),)
    print("KERNEL_OK")
</pallas_src>

<mosaic_0001>
module attributes {stable_mosaic.version = 11 : i64} {
  func.func @_encoder_kernel(%arg0: i32, %arg1: i32, %arg2: memref<1x8x32xf32, #tpu.memory_space<vmem>>, %arg3: memref<1x1x8xf32, #tpu.memory_space<vmem>>, %arg4: memref<1x32xf32, #tpu.memory_space<vmem>>, %arg5: memref<1x32xf32, #tpu.memory_space<vmem>>, %arg6: memref<1x32x96xbf16, #tpu.memory_space<vmem>>, %arg7: memref<1x1x96xf32, #tpu.memory_space<vmem>>, %arg8: memref<1x32x32xbf16, #tpu.memory_space<vmem>>, %arg9: memref<1x1x32xf32, #tpu.memory_space<vmem>>, %arg10: memref<1x1x32xf32, #tpu.memory_space<vmem>>, %arg11: memref<1x1x32xf32, #tpu.memory_space<vmem>>, %arg12: memref<1x32x64xbf16, #tpu.memory_space<vmem>>, %arg13: memref<1x1x64xf32, #tpu.memory_space<vmem>>, %arg14: memref<1x64x32xbf16, #tpu.memory_space<vmem>>, %arg15: memref<1x1x32xf32, #tpu.memory_space<vmem>>, %arg16: memref<1x1x32xf32, #tpu.memory_space<vmem>>, %arg17: memref<1x1x32xf32, #tpu.memory_space<vmem>>, %arg18: memref<32x16xf32, #tpu.memory_space<vmem>>, %arg19: memref<1x16xf32, #tpu.memory_space<vmem>>, %arg20: memref<16x3xf32, #tpu.memory_space<vmem>>, %arg21: memref<1x3xf32, #tpu.memory_space<vmem>>, %arg22: memref<1x8x3xf32, #tpu.memory_space<vmem>>, %arg23: memref<8x32xf32, #tpu.memory_space<vmem>>) attributes {dimension_semantics = [#tpu.dimension_semantics<parallel>, #tpu.dimension_semantics<arbitrary>], iteration_bounds = array<i64: 2, 2>, scalar_prefetch = 0 : i64, scratch_operands = 1 : i64, tpu.core_type = #tpu.core_type<tc>, window_params = [{transform_indices = @transform_0, window_bounds = array<i64: 1, 8, 32>}, {transform_indices = @transform_1, window_bounds = array<i64: 1, 1, 8>}, {pipeline_mode = #tpu.pipeline_mode<synchronous>, transform_indices = @transform_2, window_bounds = array<i64: 1, 32>}, {pipeline_mode = #tpu.pipeline_mode<synchronous>, transform_indices = @transform_3, window_bounds = array<i64: 1, 32>}, {transform_indices = @transform_4, window_bounds = array<i64: 1, 32, 96>}, {transform_indices = @transform_5, window_bounds = array<i64: 1, 1, 96>}, {transform_indices = @transform_6, window_bounds = array<i64: 1, 32, 32>}, {transform_indices = @transform_7, window_bounds = array<i64: 1, 1, 32>}, {transform_indices = @transform_8, window_bounds = array<i64: 1, 1, 32>}, {transform_indices = @transform_9, window_bounds = array<i64: 1, 1, 32>}, {transform_indices = @transform_10, window_bounds = array<i64: 1, 32, 64>}, {transform_indices = @transform_11, window_bounds = array<i64: 1, 1, 64>}, {transform_indices = @transform_12, window_bounds = array<i64: 1, 64, 32>}, {transform_indices = @transform_13, window_bounds = array<i64: 1, 1, 32>}, {transform_indices = @transform_14, window_bounds = array<i64: 1, 1, 32>}, {transform_indices = @transform_15, window_bounds = array<i64: 1, 1, 32>}, {pipeline_mode = #tpu.pipeline_mode<synchronous>, transform_indices = @transform_16, window_bounds = array<i64: 32, 16>}, {pipeline_mode = #tpu.pipeline_mode<synchronous>, transform_indices = @transform_17, window_bounds = array<i64: 1, 16>}, {pipeline_mode = #tpu.pipeline_mode<synchronous>, transform_indices = @transform_18, window_bounds = array<i64: 16, 3>}, {pipeline_mode = #tpu.pipeline_mode<synchronous>, transform_indices = @transform_19, window_bounds = array<i64: 1, 3>}, {transform_indices = @transform_20, window_bounds = array<i64: 1, 8, 3>}]} {
    %c0_i32 = arith.constant 0 : i32
    %0 = arith.cmpi eq, %arg1, %c0_i32 : i32
    %1 = arith.extui %0 : i1 to i32
    %c0_i32_0 = arith.constant 0 : i32
    %2 = arith.cmpi ne, %1, %c0_i32_0 : i32
    scf.if %2 {
      %c0_65 = arith.constant 0 : index
      %c0_66 = arith.constant 0 : index
      %c0_67 = arith.constant 0 : index
      %165 = vector.load %arg2[%c0_65, %c0_66, %c0_67] : memref<1x8x32xf32, #tpu.memory_space<vmem>>, vector<1x8x32xf32>
      %166 = vector.shape_cast %165 : vector<1x8x32xf32> to vector<8x32xf32>
      %c0_68 = arith.constant 0 : index
      %c0_69 = arith.constant 0 : index
      %167 = vector.load %arg4[%c0_68, %c0_69] : memref<1x32xf32, #tpu.memory_space<vmem>>, vector<1x32xf32>
      %c0_70 = arith.constant 0 : index
      %c0_71 = arith.constant 0 : index
      %168 = vector.load %arg5[%c0_70, %c0_71] : memref<1x32xf32, #tpu.memory_space<vmem>>, vector<1x32xf32>
      %cst_72 = arith.constant dense<0.000000e+00> : vector<8xf32>
      %169 = vector.multi_reduction <add>, %166, %cst_72 [1] : vector<8x32xf32> to vector<8xf32>
      %170 = vector.shape_cast %169 : vector<8xf32> to vector<8x1xf32>
      %cst_73 = arith.constant 3.200000e+01 : f32
      %171 = vector.broadcast %cst_73 : f32 to vector<8x1xf32>
      %172 = arith.divf %170, %171 : vector<8x1xf32>
      %173 = vector.broadcast %172 : vector<8x1xf32> to vector<8x32xf32>
      %174 = arith.subf %166, %173 : vector<8x32xf32>
      %175 = arith.mulf %174, %174 : vector<8x32xf32>
      %cst_74 = arith.constant dense<0.000000e+00> : vector<8xf32>
      %176 = vector.multi_reduction <add>, %175, %cst_74 [1] : vector<8x32xf32> to vector<8xf32>
      %177 = vector.shape_cast %176 : vector<8xf32> to vector<8x1xf32>
      %cst_75 = arith.constant 3.200000e+01 : f32
      %178 = vector.broadcast %cst_75 : f32 to vector<8x1xf32>
      %179 = arith.divf %177, %178 : vector<8x1xf32>
      %180 = vector.broadcast %172 : vector<8x1xf32> to vector<8x32xf32>
      %181 = arith.subf %166, %180 : vector<8x32xf32>
      %cst_76 = arith.constant 9.99999974E-6 : f32
      %182 = vector.broadcast %cst_76 : f32 to vector<8x1xf32>
      %183 = arith.addf %179, %182 : vector<8x1xf32>
      %184 = math.rsqrt %183 : vector<8x1xf32>
      %185 = vector.broadcast %184 : vector<8x1xf32> to vector<8x32xf32>
      %186 = arith.mulf %181, %185 : vector<8x32xf32>
      %187 = vector.broadcast %167 : vector<1x32xf32> to vector<8x32xf32>
      %188 = arith.mulf %186, %187 : vector<8x32xf32>
      %189 = vector.broadcast %168 : vector<1x32xf32> to vector<8x32xf32>
      %190 = arith.addf %188, %189 : vector<8x32xf32>
      %c0_77 = arith.constant 0 : index
      %c0_78 = arith.constant 0 : index
      %191 = vector.load %arg23[%c0_77, %c0_78] : memref<8x32xf32, #tpu.memory_space<vmem>>, vector<8x32xf32>
      tpu.vector_store %arg23[%c0_77, %c0_78], %190 {strides = array<i32>} : memref<8x32xf32, #tpu.memory_space<vmem>>, vector<8x32xf32>,
    } else {
    }
    %c0 = arith.constant 0 : index
    %c0_1 = arith.constant 0 : index
    %3 = vector.load %arg23[%c0, %c0_1] : memref<8x32xf32, #tpu.memory_space<vmem>>, vector<8x32xf32>
    %4 = arith.truncf %3 : vector<8x32xf32> to vector<8x32xbf16>
    %c0_2 = arith.constant 0 : index
    %c0_3 = arith.constant 0 : index
    %c0_4 = arith.constant 0 : index
    %5 = vector.load %arg6[%c0_2, %c0_3, %c0_4] : memref<1x32x96xbf16, #tpu.memory_space<vmem>>, vector<1x32x96xbf16>
    %6 = vector.shape_cast %5 : vector<1x32x96xbf16> to vector<32x96xbf16>
    %cst = arith.constant dense<0.000000e+00> : vector<8x96xf32>
    %7 = tpu.matmul %4, %6, %cst {dimension_numbers = #tpu.dot_dimension_numbers<[1], [0], [0], [1], [0, 0, 1, 1], [], []>} : vector<8x32xbf16>, vector<32x96xbf16>, vector<8x96xf32> -> vector<8x96xf32>
    %c0_5 = arith.constant 0 : index
    %c0_6 = arith.constant 0 : index
    %c0_7 = arith.constant 0 : index
    %8 = vector.load %arg7[%c0_5, %c0_6, %c0_7] : memref<1x1x96xf32, #tpu.memory_space<vmem>>, vector<1x1x96xf32>
    %9 = vector.shape_cast %8 : vector<1x1x96xf32> to vector<1x96xf32>
    %10 = vector.broadcast %9 : vector<1x96xf32> to vector<8x96xf32>
    %11 = arith.addf %7, %10 : vector<8x96xf32>
    %12 = vector.extract_strided_slice %11 {offsets = [0, 0], sizes = [8, 32], strides = [1, 1]} : vector<8x96xf32> to vector<8x32xf32>
    %13 = vector.extract_strided_slice %11 {offsets = [0, 32], sizes = [8, 32], strides = [1, 1]} : vector<8x96xf32> to vector<8x32xf32>
    %14 = vector.extract_strided_slice %11 {offsets = [0, 64], sizes = [8, 32], strides = [1, 1]} : vector<8x96xf32> to vector<8x32xf32>
    %15 = vector.extract_strided_slice %12 {offsets = [0, 0], sizes = [8, 8], strides = [1, 1]} : vector<8x32xf32> to vector<8x8xf32>
    %16 = vector.extract_strided_slice %12 {offsets = [0, 8], sizes = [8, 8], strides = [1, 1]} : vector<8x32xf32> to vector<8x8xf32>
    %17 = vector.extract_strided_slice %12 {offsets = [0, 16], sizes = [8, 8], strides = [1, 1]} : vector<8x32xf32> to vector<8x8xf32>
    %18 = vector.extract_strided_slice %12 {offsets = [0, 24], sizes = [8, 8], strides = [1, 1]} : vector<8x32xf32> to vector<8x8xf32>
    %19 = vector.shape_cast %15 : vector<8x8xf32> to vector<1x8x8xf32>
    %20 = vector.shape_cast %16 : vector<8x8xf32> to vector<1x8x8xf32>
    %21 = vector.shape_cast %17 : vector<8x8xf32> to vector<1x8x8xf32>
    %22 = vector.shape_cast %18 : vector<8x8xf32> to vector<1x8x8xf32>
    %23 = tpu.concatenate %19, %20, %21, %22 in 0 : vector<1x8x8xf32>, vector<1x8x8xf32>, vector<1x8x8xf32>, vector<1x8x8xf32> -> vector<4x8x8xf32>
    %24 = vector.extract_strided_slice %13 {offsets = [0, 0], sizes = [8, 8], strides = [1, 1]} : vector<8x32xf32> to vector<8x8xf32>
    %25 = vector.extract_strided_slice %13 {offsets = [0, 8], sizes = [8, 8], strides = [1, 1]} : vector<8x32xf32> to vector<8x8xf32>
    %26 = vector.extract_strided_slice %13 {offsets = [0, 16], sizes = [8, 8], strides = [1, 1]} : vector<8x32xf32> to vector<8x8xf32>
    %27 = vector.extract_strided_slice %13 {offsets = [0, 24], sizes = [8, 8], strides = [1, 1]} : vector<8x32xf32> to vector<8x8xf32>
    %28 = vector.shape_cast %24 : vector<8x8xf32> to vector<1x8x8xf32>
    %29 = vector.shape_cast %25 : vector<8x8xf32> to vector<1x8x8xf32>
    %30 = vector.shape_cast %26 : vector<8x8xf32> to vector<1x8x8xf32>
    %31 = vector.shape_cast %27 : vector<8x8xf32> to vector<1x8x8xf32>
    %32 = tpu.concatenate %28, %29, %30, %31 in 0 : vector<1x8x8xf32>, vector<1x8x8xf32>, vector<1x8x8xf32>, vector<1x8x8xf32> -> vector<4x8x8xf32>
    %33 = vector.extract_strided_slice %14 {offsets = [0, 0], sizes = [8, 8], strides = [1, 1]} : vector<8x32xf32> to vector<8x8xf32>
    %34 = vector.extract_strided_slice %14 {offsets = [0, 8], sizes = [8, 8], strides = [1, 1]} : vector<8x32xf32> to vector<8x8xf32>
    %35 = vector.extract_strided_slice %14 {offsets = [0, 16], sizes = [8, 8], strides = [1, 1]} : vector<8x32xf32> to vector<8x8xf32>
    %36 = vector.extract_strided_slice %14 {offsets = [0, 24], sizes = [8, 8], strides = [1, 1]} : vector<8x32xf32> to vector<8x8xf32>
    %37 = vector.shape_cast %33 : vector<8x8xf32> to vector<1x8x8xf32>
    %38 = vector.shape_cast %34 : vector<8x8xf32> to vector<1x8x8xf32>
    %39 = vector.shape_cast %35 : vector<8x8xf32> to vector<1x8x8xf32>
    %40 = vector.shape_cast %36 : vector<8x8xf32> to vector<1x8x8xf32>
    %41 = tpu.concatenate %37, %38, %39, %40 in 0 : vector<1x8x8xf32>, vector<1x8x8xf32>, vector<1x8x8xf32>, vector<1x8x8xf32> -> vector<4x8x8xf32>
    %42 = arith.truncf %23 : vector<4x8x8xf32> to vector<4x8x8xbf16>
    %43 = arith.truncf %32 : vector<4x8x8xf32> to vector<4x8x8xbf16>
    "tpu.trace_start"() <{level = 10 : i32, message = "hqd,hkd->hqk"}> : () -> ()
    %cst_8 = arith.constant dense<0.000000e+00> : vector<4x8x8xf32>
    %44 = tpu.matmul %42, %43, %cst_8 {dimension_numbers = #tpu.dot_dimension_numbers<[2], [2], [1], [1], [0, 0, 0, 1, 1, 1], [0], [0]>} : vector<4x8x8xbf16>, vector<4x8x8xbf16>, vector<4x8x8xf32> -> vector<4x8x8xf32>
    "tpu.trace_stop"() : () -> ()
    %c0_9 = arith.constant 0 : index
    %c0_10 = arith.constant 0 : index
    %c0_11 = arith.constant 0 : index
    %45 = vector.load %arg3[%c0_9, %c0_10, %c0_11] : memref<1x1x8xf32, #tpu.memory_space<vmem>>, vector<1x1x8xf32>
    %46 = vector.broadcast %45 : vector<1x1x8xf32> to vector<4x8x8xf32>
    %47 = arith.addf %44, %46 : vector<4x8x8xf32>
    %cst_12 = arith.constant dense<0xFF800000> : vector<4x8xf32>
    %48 = vector.multi_reduction <maximumf>, %47, %cst_12 [2] : vector<4x8x8xf32> to vector<4x8xf32>
    %49 = vector.shape_cast %48 : vector<4x8xf32> to vector<4x8x1xf32>
    %50 = vector.broadcast %49 : vector<4x8x1xf32> to vector<4x8x8xf32>
    %51 = arith.subf %47, %50 : vector<4x8x8xf32>
    %52 = math.exp %51 : vector<4x8x8xf32>
    %cst_13 = arith.constant dense<0.000000e+00> : vector<4x8xf32>
    %53 = vector.multi_reduction <add>, %52, %cst_13 [2] : vector<4x8x8xf32> to vector<4x8xf32>
    %54 = vector.shape_cast %53 : vector<4x8xf32> to vector<4x8x1xf32>
    %55 = tpu.reciprocal %54 : vector<4x8x1xf32> -> vector<4x8x1xf32>
    %56 = vector.broadcast %55 : vector<4x8x1xf32> to vector<4x8x8xf32>
    %57 = arith.mulf %52, %56 : vector<4x8x8xf32>
    %58 = arith.truncf %57 : vector<4x8x8xf32> to vector<4x8x8xbf16>
    %59 = arith.truncf %41 : vector<4x8x8xf32> to vector<4x8x8xbf16>
    "tpu.trace_start"() <{level = 10 : i32, message = "hqk,hkd->hqd"}> : () -> ()
    %cst_14 = arith.constant dense<0.000000e+00> : vector<4x8x8xf32>
    %60 = tpu.matmul %58, %59, %cst_14 {dimension_numbers = #tpu.dot_dimension_numbers<[2], [1], [1], [2], [0, 0, 0, 1, 1, 2], [0], [0]>} : vector<4x8x8xbf16>, vector<4x8x8xbf16>, vector<4x8x8xf32> -> vector<4x8x8xf32>
    "tpu.trace_stop"() : () -> ()
    %61 = vector.extract_strided_slice %60 {offsets = [0, 0, 0], sizes = [1, 8, 8], strides = [1, 1, 1]} : vector<4x8x8xf32> to vector<1x8x8xf32>
    %62 = vector.shape_cast %61 : vector<1x8x8xf32> to vector<8x8xf32>
    %63 = vector.extract_strided_slice %60 {offsets = [1, 0, 0], sizes = [1, 8, 8], strides = [1, 1, 1]} : vector<4x8x8xf32> to vector<1x8x8xf32>
    %64 = vector.shape_cast %63 : vector<1x8x8xf32> to vector<8x8xf32>
    %65 = vector.extract_strided_slice %60 {offsets = [2, 0, 0], sizes = [1, 8, 8], strides = [1, 1, 1]} : vector<4x8x8xf32> to vector<1x8x8xf32>
    %66 = vector.shape_cast %65 : vector<1x8x8xf32> to vector<8x8xf32>
    %67 = vector.extract_strided_slice %60 {offsets = [3, 0, 0], sizes = [1, 8, 8], strides = [1, 1, 1]} : vector<4x8x8xf32> to vector<1x8x8xf32>
    %68 = vector.shape_cast %67 : vector<1x8x8xf32> to vector<8x8xf32>
    %69 = tpu.concatenate %62, %64, %66, %68 in 1 : vector<8x8xf32>, vector<8x8xf32>, vector<8x8xf32>, vector<8x8xf32> -> vector<8x32xf32>
    %70 = arith.truncf %69 : vector<8x32xf32> to vector<8x32xbf16>
    %c0_15 = arith.constant 0 : index
    %c0_16 = arith.constant 0 : index
    %c0_17 = arith.constant 0 : index
    %71 = vector.load %arg8[%c0_15, %c0_16, %c0_17] : memref<1x32x32xbf16, #tpu.memory_space<vmem>>, vector<1x32x32xbf16>
    %72 = vector.shape_cast %71 : vector<1x32x32xbf16> to vector<32x32xbf16>
    %cst_18 = arith.constant dense<0.000000e+00> : vector<8x32xf32>
    %73 = tpu.matmul %70, %72, %cst_18 {dimension_numbers = #tpu.dot_dimension_numbers<[1], [0], [0], [1], [0, 0, 1, 1], [], []>} : vector<8x32xbf16>, vector<32x32xbf16>, vector<8x32xf32> -> vector<8x32xf32>
    %c0_19 = arith.constant 0 : index
    %c0_20 = arith.constant 0 : index
    %c0_21 = arith.constant 0 : index
    %74 = vector.load %arg9[%c0_19, %c0_20, %c0_21] : memref<1x1x32xf32, #tpu.memory_space<vmem>>, vector<1x1x32xf32>
    %75 = vector.shape_cast %74 : vector<1x1x32xf32> to vector<1x32xf32>
    %76 = vector.broadcast %75 : vector<1x32xf32> to vector<8x32xf32>
    %77 = arith.addf %73, %76 : vector<8x32xf32>
    %78 = arith.addf %3, %77 : vector<8x32xf32>
    %c0_22 = arith.constant 0 : index
    %c0_23 = arith.constant 0 : index
    %c0_24 = arith.constant 0 : index
    %79 = vector.load %arg10[%c0_22, %c0_23, %c0_24] : memref<1x1x32xf32, #tpu.memory_space<vmem>>, vector<1x1x32xf32>
    %80 = vector.shape_cast %79 : vector<1x1x32xf32> to vector<1x32xf32>
    %c0_25 = arith.constant 0 : index
    %c0_26 = arith.constant 0 : index
    %c0_27 = arith.constant 0 : index
    %81 = vector.load %arg11[%c0_25, %c0_26, %c0_27] : memref<1x1x32xf32, #tpu.memory_space<vmem>>, vector<1x1x32xf32>
    %82 = vector.shape_cast %81 : vector<1x1x32xf32> to vector<1x32xf32>
    %cst_28 = arith.constant dense<0.000000e+00> : vector<8xf32>
    %83 = vector.multi_reduction <add>, %78, %cst_28 [1] : vector<8x32xf32> to vector<8xf32>
    %84 = vector.shape_cast %83 : vector<8xf32> to vector<8x1xf32>
    %cst_29 = arith.constant 3.200000e+01 : f32
    %85 = vector.broadcast %cst_29 : f32 to vector<8x1xf32>
    %86 = arith.divf %84, %85 : vector<8x1xf32>
    %87 = vector.broadcast %86 : vector<8x1xf32> to vector<8x32xf32>
    %88 = arith.subf %78, %87 : vector<8x32xf32>
    %89 = arith.mulf %88, %88 : vector<8x32xf32>
    %cst_30 = arith.constant dense<0.000000e+00> : vector<8xf32>
    %90 = vector.multi_reduction <add>, %89, %cst_30 [1] : vector<8x32xf32> to vector<8xf32>
    %91 = vector.shape_cast %90 : vector<8xf32> to vector<8x1xf32>
    %cst_31 = arith.constant 3.200000e+01 : f32
    %92 = vector.broadcast %cst_31 : f32 to vector<8x1xf32>
    %93 = arith.divf %91, %92 : vector<8x1xf32>
    %94 = vector.broadcast %86 : vector<8x1xf32> to vector<8x32xf32>
    %95 = arith.subf %78, %94 : vector<8x32xf32>
    %cst_32 = arith.constant 9.99999974E-6 : f32
    %96 = vector.broadcast %cst_32 : f32 to vector<8x1xf32>
    %97 = arith.addf %93, %96 : vector<8x1xf32>
    %98 = math.rsqrt %97 : vector<8x1xf32>
    %99 = vector.broadcast %98 : vector<8x1xf32> to vector<8x32xf32>
    %100 = arith.mulf %95, %99 : vector<8x32xf32>
    %101 = vector.broadcast %80 : vector<1x32xf32> to vector<8x32xf32>
    %102 = arith.mulf %100, %101 : vector<8x32xf32>
    %103 = vector.broadcast %82 : vector<1x32xf32> to vector<8x32xf32>
    %104 = arith.addf %102, %103 : vector<8x32xf32>
    %105 = arith.truncf %104 : vector<8x32xf32> to vector<8x32xbf16>
    %c0_33 = arith.constant 0 : index
    %c0_34 = arith.constant 0 : index
    %c0_35 = arith.constant 0 : index
    %106 = vector.load %arg12[%c0_33, %c0_34, %c0_35] : memref<1x32x64xbf16, #tpu.memory_space<vmem>>, vector<1x32x64xbf16>
    %107 = vector.shape_cast %106 : vector<1x32x64xbf16> to vector<32x64xbf16>
    %cst_36 = arith.constant dense<0.000000e+00> : vector<8x64xf32>
    %108 = tpu.matmul %105, %107, %cst_36 {dimension_numbers = #tpu.dot_dimension_numbers<[1], [0], [0], [1], [0, 0, 1, 1], [], []>} : vector<8x32xbf16>, vector<32x64xbf16>, vector<8x64xf32> -> vector<8x64xf32>
    %c0_37 = arith.constant 0 : index
    %c0_38 = arith.constant 0 : index
    %c0_39 = arith.constant 0 : index
    %109 = vector.load %arg13[%c0_37, %c0_38, %c0_39] : memref<1x1x64xf32, #tpu.memory_space<vmem>>, vector<1x1x64xf32>
    %110 = vector.shape_cast %109 : vector<1x1x64xf32> to vector<1x64xf32>
    %111 = vector.broadcast %110 : vector<1x64xf32> to vector<8x64xf32>
    %112 = arith.addf %108, %111 : vector<8x64xf32>
    %cst_40 = arith.constant 5.000000e-01 : f32
    %113 = vector.broadcast %cst_40 : f32 to vector<8x64xf32>
    %114 = arith.mulf %113, %112 : vector<8x64xf32>
    %cst_41 = arith.constant 4.471500e-02 : f32
    %115 = vector.broadcast %cst_41 : f32 to vector<8x64xf32>
    %116 = arith.mulf %115, %112 : vector<8x64xf32>
    %117 = arith.mulf %116, %112 : vector<8x64xf32>
    %118 = arith.mulf %117, %112 : vector<8x64xf32>
    %119 = arith.addf %112, %118 : vector<8x64xf32>
    %cst_42 = arith.constant 0.797884583 : f32
    %120 = vector.broadcast %cst_42 : f32 to vector<8x64xf32>
    %121 = arith.mulf %120, %119 : vector<8x64xf32>
    %122 = math.tanh %121 : vector<8x64xf32>
    %cst_43 = arith.constant 1.000000e+00 : f32
    %123 = vector.broadcast %cst_43 : f32 to vector<8x64xf32>
    %124 = arith.addf %123, %122 : vector<8x64xf32>
    %125 = arith.mulf %114, %124 : vector<8x64xf32>
    %126 = arith.truncf %125 : vector<8x64xf32> to vector<8x64xbf16>
    %c0_44 = arith.constant 0 : index
    %c0_45 = arith.constant 0 : index
    %c0_46 = arith.constant 0 : index
    %127 = vector.load %arg14[%c0_44, %c0_45, %c0_46] : memref<1x64x32xbf16, #tpu.memory_space<vmem>>, vector<1x64x32xbf16>
    %128 = vector.shape_cast %127 : vector<1x64x32xbf16> to vector<64x32xbf16>
    %cst_47 = arith.constant dense<0.000000e+00> : vector<8x32xf32>
    %129 = tpu.matmul %126, %128, %cst_47 {dimension_numbers = #tpu.dot_dimension_numbers<[1], [0], [0], [1], [0, 0, 1, 1], [], []>} : vector<8x64xbf16>, vector<64x32xbf16>, vector<8x32xf32> -> vector<8x32xf32>
    %c0_48 = arith.constant 0 : index
    %c0_49 = arith.constant 0 : index
    %c0_50 = arith.constant 0 : index
    %130 = vector.load %arg15[%c0_48, %c0_49, %c0_50] : memref<1x1x32xf32, #tpu.memory_space<vmem>>, vector<1x1x32xf32>
    %131 = vector.shape_cast %130 : vector<1x1x32xf32> to vector<1x32xf32>
    %132 = vector.broadcast %131 : vector<1x32xf32> to vector<8x32xf32>
    %133 = arith.addf %129, %132 : vector<8x32xf32>
    %134 = arith.addf %104, %133 : vector<8x32xf32>
    %c0_51 = arith.constant 0 : index
    %c0_52 = arith.constant 0 : index
    %c0_53 = arith.constant 0 : index
    %135 = vector.load %arg16[%c0_51, %c0_52, %c0_53] : memref<1x1x32xf32, #tpu.memory_space<vmem>>, vector<1x1x32xf32>
    %136 = vector.shape_cast %135 : vector<1x1x32xf32> to vector<1x32xf32>
    %c0_54 = arith.constant 0 : index
    %c0_55 = arith.constant 0 : index
    %c0_56 = arith.constant 0 : index
    %137 = vector.load %arg17[%c0_54, %c0_55, %c0_56] : memref<1x1x32xf32, #tpu.memory_space<vmem>>, vector<1x1x32xf32>
    %138 = vector.shape_cast %137 : vector<1x1x32xf32> to vector<1x32xf32>
    %cst_57 = arith.constant dense<0.000000e+00> : vector<8xf32>
    %139 = vector.multi_reduction <add>, %134, %cst_57 [1] : vector<8x32xf32> to vector<8xf32>
    %140 = vector.shape_cast %139 : vector<8xf32> to vector<8x1xf32>
    %cst_58 = arith.constant 3.200000e+01 : f32
    %141 = vector.broadcast %cst_58 : f32 to vector<8x1xf32>
    %142 = arith.divf %140, %141 : vector<8x1xf32>
    %143 = vector.broadcast %142 : vector<8x1xf32> to vector<8x32xf32>
    %144 = arith.subf %134, %143 : vector<8x32xf32>
    %145 = arith.mulf %144, %144 : vector<8x32xf32>
    %cst_59 = arith.constant dense<0.000000e+00> : vector<8xf32>
    %146 = vector.multi_reduction <add>, %145, %cst_59 [1] : vector<8x32xf32> to vector<8xf32>
    %147 = vector.shape_cast %146 : vector<8xf32> to vector<8x1xf32>
    %cst_60 = arith.constant 3.200000e+01 : f32
    %148 = vector.broadcast %cst_60 : f32 to vector<8x1xf32>
    %149 = arith.divf %147, %148 : vector<8x1xf32>
    %150 = vector.broadcast %142 : vector<8x1xf32> to vector<8x32xf32>
    %151 = arith.subf %134, %150 : vector<8x32xf32>
    %cst_61 = arith.constant 9.99999974E-6 : f32
    %152 = vector.broadcast %cst_61 : f32 to vector<8x1xf32>
    %153 = arith.addf %149, %152 : vector<8x1xf32>
    %154 = math.rsqrt %153 : vector<8x1xf32>
    %155 = vector.broadcast %154 : vector<8x1xf32> to vector<8x32xf32>
    %156 = arith.mulf %151, %155 : vector<8x32xf32>
    %157 = vector.broadcast %136 : vector<1x32xf32> to vector<8x32xf32>
    %158 = arith.mulf %156, %157 : vector<8x32xf32>
    %159 = vector.broadcast %138 : vector<1x32xf32> to vector<8x32xf32>
    %160 = arith.addf %158, %159 : vector<8x32xf32>
    %c0_62 = arith.constant 0 : index
    %c0_63 = arith.constant 0 : index
    %161 = vector.load %arg23[%c0_62, %c0_63] : memref<8x32xf32, #tpu.memory_space<vmem>>, vector<8x32xf32>
    tpu.vector_store %arg23[%c0_62, %c0_63], %160 {strides = array<i32>} : memref<8x32xf32, #tpu.memory_space<vmem>>, vector<8x32xf32>,
    %c1_i32 = arith.constant 1 : i32
    %162 = arith.cmpi eq, %arg1, %c1_i32 : i32
    %163 = arith.extui %162 : i1 to i32
    %c0_i32_64 = arith.constant 0 : i32
    %164 = arith.cmpi ne, %163, %c0_i32_64 : i32
    scf.if %164 {
      %c0_65 = arith.constant 0 : index
      %c0_66 = arith.constant 0 : index
      %165 = vector.load %arg18[%c0_65, %c0_66] : memref<32x16xf32, #tpu.memory_space<vmem>>, vector<32x16xf32>
      %cst_67 = arith.constant dense<0.000000e+00> : vector<8x16xf32>
      %166 = tpu.matmul %160, %165, %cst_67 {dimension_numbers = #tpu.dot_dimension_numbers<[1], [0], [0], [1], [0, 0, 1, 1], [], []>} : vector<8x32xf32>, vector<32x16xf32>, vector<8x16xf32> -> vector<8x16xf32>
      %c0_68 = arith.constant 0 : index
      %c0_69 = arith.constant 0 : index
      %167 = vector.load %arg19[%c0_68, %c0_69] : memref<1x16xf32, #tpu.memory_space<vmem>>, vector<1x16xf32>
      %168 = vector.broadcast %167 : vector<1x16xf32> to vector<8x16xf32>
      %169 = arith.addf %166, %168 : vector<8x16xf32>
      %170 = math.tanh %169 : vector<8x16xf32>
      %c0_70 = arith.constant 0 : index
      %c0_71 = arith.constant 0 : index
      %171 = vector.load %arg20[%c0_70, %c0_71] : memref<16x3xf32, #tpu.memory_space<vmem>>, vector<16x3xf32>
      %cst_72 = arith.constant dense<0.000000e+00> : vector<8x3xf32>
      %172 = tpu.matmul %170, %171, %cst_72 {dimension_numbers = #tpu.dot_dimension_numbers<[1], [0], [0], [1], [0, 0, 1, 1], [], []>} : vector<8x16xf32>, vector<16x3xf32>, vector<8x3xf32> -> vector<8x3xf32>
      %c0_73 = arith.constant 0 : index
      %c0_74 = arith.constant 0 : index
      %173 = vector.load %arg21[%c0_73, %c0_74] : memref<1x3xf32, #tpu.memory_space<vmem>>, vector<1x3xf32>
      %174 = vector.broadcast %173 : vector<1x3xf32> to vector<8x3xf32>
      %175 = arith.addf %172, %174 : vector<8x3xf32>
      %c0_75 = arith.constant 0 : index
      %c0_76 = arith.constant 0 : index
      %c0_77 = arith.constant 0 : index
      %176 = vector.load %arg22[%c0_75, %c0_76, %c0_77] : memref<1x8x3xf32, #tpu.memory_space<vmem>>, vector<1x8x3xf32>
      %177 = vector.shape_cast %176 : vector<1x8x3xf32> to vector<8x3xf32>
      %178 = vector.shape_cast %175 : vector<8x3xf32> to vector<1x8x3xf32>
      tpu.vector_store %arg22[%c0_75, %c0_76, %c0_77], %178 {strides = array<i32>} : memref<1x8x3xf32, #tpu.memory_space<vmem>>, vector<1x8x3xf32>,
    } else {
    }
    return
  }
  func.func @transform_0(%arg0: i32, %arg1: i32) -> (i32, i32, i32) {
    %c0_i32 = arith.constant 0 : i32
    %c0_i32_0 = arith.constant 0 : i32
    %c0_i32_1 = arith.constant 0 : i32
    return %arg0, %c0_i32, %c0_i32_0 : i32, i32, i32
  }
  func.func @transform_1(%arg0: i32, %arg1: i32) -> (i32, i32, i32) {
    %c0_i32 = arith.constant 0 : i32
    %c0_i32_0 = arith.constant 0 : i32
    %c0_i32_1 = arith.constant 0 : i32
    return %arg0, %c0_i32, %c0_i32_0 : i32, i32, i32
  }
  func.func @transform_2(%arg0: i32, %arg1: i32) -> (i32, i32) {
    %c0_i32 = arith.constant 0 : i32
    %c0_i32_0 = arith.constant 0 : i32
    %c0_i32_1 = arith.constant 0 : i32
    return %c0_i32, %c0_i32_0 : i32, i32
  }
  func.func @transform_3(%arg0: i32, %arg1: i32) -> (i32, i32) {
    %c0_i32 = arith.constant 0 : i32
    %c0_i32_0 = arith.constant 0 : i32
    %c0_i32_1 = arith.constant 0 : i32
    return %c0_i32, %c0_i32_0 : i32, i32
  }
  func.func @transform_4(%arg0: i32, %arg1: i32) -> (i32, i32, i32) {
    %c0_i32 = arith.constant 0 : i32
    %c0_i32_0 = arith.constant 0 : i32
    %c0_i32_1 = arith.constant 0 : i32
    return %arg1, %c0_i32, %c0_i32_0 : i32, i32, i32
  }
  func.func @transform_5(%arg0: i32, %arg1: i32) -> (i32, i32, i32) {
    %c0_i32 = arith.constant 0 : i32
    %c0_i32_0 = arith.constant 0 : i32
    %c0_i32_1 = arith.constant 0 : i32
    return %arg1, %c0_i32, %c0_i32_0 : i32, i32, i32
  }
  func.func @transform_6(%arg0: i32, %arg1: i32) -> (i32, i32, i32) {
    %c0_i32 = arith.constant 0 : i32
    %c0_i32_0 = arith.constant 0 : i32
    %c0_i32_1 = arith.constant 0 : i32
    return %arg1, %c0_i32, %c0_i32_0 : i32, i32, i32
  }
  func.func @transform_7(%arg0: i32, %arg1: i32) -> (i32, i32, i32) {
    %c0_i32 = arith.constant 0 : i32
    %c0_i32_0 = arith.constant 0 : i32
    %c0_i32_1 = arith.constant 0 : i32
    return %arg1, %c0_i32, %c0_i32_0 : i32, i32, i32
  }
  func.func @transform_8(%arg0: i32, %arg1: i32) -> (i32, i32, i32) {
    %c0_i32 = arith.constant 0 : i32
    %c0_i32_0 = arith.constant 0 : i32
    %c0_i32_1 = arith.constant 0 : i32
    return %arg1, %c0_i32, %c0_i32_0 : i32, i32, i32
  }
  func.func @transform_9(%arg0: i32, %arg1: i32) -> (i32, i32, i32) {
    %c0_i32 = arith.constant 0 : i32
    %c0_i32_0 = arith.constant 0 : i32
    %c0_i32_1 = arith.constant 0 : i32
    return %arg1, %c0_i32, %c0_i32_0 : i32, i32, i32
  }
  func.func @transform_10(%arg0: i32, %arg1: i32) -> (i32, i32, i32) {
    %c0_i32 = arith.constant 0 : i32
    %c0_i32_0 = arith.constant 0 : i32
    %c0_i32_1 = arith.constant 0 : i32
    return %arg1, %c0_i32, %c0_i32_0 : i32, i32, i32
  }
  func.func @transform_11(%arg0: i32, %arg1: i32) -> (i32, i32, i32) {
    %c0_i32 = arith.constant 0 : i32
    %c0_i32_0 = arith.constant 0 : i32
    %c0_i32_1 = arith.constant 0 : i32
    return %arg1, %c0_i32, %c0_i32_0 : i32, i32, i32
  }
  func.func @transform_12(%arg0: i32, %arg1: i32) -> (i32, i32, i32) {
    %c0_i32 = arith.constant 0 : i32
    %c0_i32_0 = arith.constant 0 : i32
    %c0_i32_1 = arith.constant 0 : i32
    return %arg1, %c0_i32, %c0_i32_0 : i32, i32, i32
  }
  func.func @transform_13(%arg0: i32, %arg1: i32) -> (i32, i32, i32) {
    %c0_i32 = arith.constant 0 : i32
    %c0_i32_0 = arith.constant 0 : i32
    %c0_i32_1 = arith.constant 0 : i32
    return %arg1, %c0_i32, %c0_i32_0 : i32, i32, i32
  }
  func.func @transform_14(%arg0: i32, %arg1: i32) -> (i32, i32, i32) {
    %c0_i32 = arith.constant 0 : i32
    %c0_i32_0 = arith.constant 0 : i32
    %c0_i32_1 = arith.constant 0 : i32
    return %arg1, %c0_i32, %c0_i32_0 : i32, i32, i32
  }
  func.func @transform_15(%arg0: i32, %arg1: i32) -> (i32, i32, i32) {
    %c0_i32 = arith.constant 0 : i32
    %c0_i32_0 = arith.constant 0 : i32
    %c0_i32_1 = arith.constant 0 : i32
    return %arg1, %c0_i32, %c0_i32_0 : i32, i32, i32
  }
  func.func @transform_16(%arg0: i32, %arg1: i32) -> (i32, i32) {
    %c0_i32 = arith.constant 0 : i32
    %c0_i32_0 = arith.constant 0 : i32
    %c0_i32_1 = arith.constant 0 : i32
    return %c0_i32, %c0_i32_0 : i32, i32
  }
  func.func @transform_17(%arg0: i32, %arg1: i32) -> (i32, i32) {
    %c0_i32 = arith.constant 0 : i32
    %c0_i32_0 = arith.constant 0 : i32
    %c0_i32_1 = arith.constant 0 : i32
    return %c0_i32, %c0_i32_0 : i32, i32
  }
  func.func @transform_18(%arg0: i32, %arg1: i32) -> (i32, i32) {
    %c0_i32 = arith.constant 0 : i32
    %c0_i32_0 = arith.constant 0 : i32
    %c0_i32_1 = arith.constant 0 : i32
    return %c0_i32, %c0_i32_0 : i32, i32
  }
  func.func @transform_19(%arg0: i32, %arg1: i32) -> (i32, i32) {
    %c0_i32 = arith.constant 0 : i32
    %c0_i32_0 = arith.constant 0 : i32
    %c0_i32_1 = arith.constant 0 : i32
    return %c0_i32, %c0_i32_0 : i32, i32
  }
  func.func @transform_20(%arg0: i32, %arg1: i32) -> (i32, i32, i32) {
    %c0_i32 = arith.constant 0 : i32
    %c0_i32_0 = arith.constant 0 : i32
    %c0_i32_1 = arith.constant 0 : i32
    return %arg0, %c0_i32, %c0_i32_0 : i32, i32, i32
  }
}

</mosaic_0001>

<llo_original>
// kernel: tpu_custom_call.1
$region0: #{tpu_custom_call.1}
  #allocation0 [shape = 'u32[]', space=smem, size = 0x4, offset = 0x4, fixed_abs, tag = 'smem constant byte address 0x4 - core index']
  #allocation1 [shape = 'u32[144,128]{1,0:T(1,128)}', space=vmem, size = 0x12000, scoped, tag = 'internal scratch']
  #allocation2 [shape = 'f32[8,32]{1,0:T(8,128)}', space=vmem, size = 0x1000, scoped, tag = 'scratch operand']
  %s0 = inlined_call_operand.vmem [shape: f32[2,8,32], index: 0, kind: input, shape index: {}]
  %s1 = inlined_call_operand.vmem [shape: f32[2,1,8], index: 1, kind: input, shape index: {}]
  %s2 = inlined_call_operand.hbm [shape: f32[1,32], index: 2, kind: input, shape index: {}]
  %s3 = inlined_call_operand.hbm [shape: f32[1,32], index: 3, kind: input, shape index: {}]
  %s4 = inlined_call_operand.vmem [shape: bf16[2,32,96], index: 4, kind: input, shape index: {}]
  %s5 = inlined_call_operand.vmem [shape: f32[2,1,96], index: 5, kind: input, shape index: {}]
  %s6 = inlined_call_operand.vmem [shape: bf16[2,32,32], index: 6, kind: input, shape index: {}]
  %s7 = inlined_call_operand.vmem [shape: f32[2,1,32], index: 7, kind: input, shape index: {}]
  %s8 = inlined_call_operand.vmem [shape: f32[2,1,32], index: 8, kind: input, shape index: {}]
  %s9 = inlined_call_operand.vmem [shape: f32[2,1,32], index: 9, kind: input, shape index: {}]
  %s10 = inlined_call_operand.vmem [shape: bf16[2,32,64], index: 10, kind: input, shape index: {}]
  %s11 = inlined_call_operand.vmem [shape: f32[2,1,64], index: 11, kind: input, shape index: {}]
  %s12 = inlined_call_operand.vmem [shape: bf16[2,64,32], index: 12, kind: input, shape index: {}]
  %s13 = inlined_call_operand.vmem [shape: f32[2,1,32], index: 13, kind: input, shape index: {}]
  %s14 = inlined_call_operand.vmem [shape: f32[2,1,32], index: 14, kind: input, shape index: {}]
  %s15 = inlined_call_operand.vmem [shape: f32[2,1,32], index: 15, kind: input, shape index: {}]
  %s16 = inlined_call_operand.vmem [shape: f32[32,16], index: 16, kind: input, shape index: {}]
  %s17 = inlined_call_operand.vmem [shape: f32[1,16], index: 17, kind: input, shape index: {}]
  %s18 = inlined_call_operand.vmem [shape: f32[16,3], index: 18, kind: input, shape index: {}]
  %s19 = inlined_call_operand.vmem [shape: f32[1,3], index: 19, kind: input, shape index: {}]
  %s20 = inlined_call_operand.vmem [shape: f32[2,8,3], index: 20, kind: output, shape index: {}]
  %s21 = sld [smem:[#allocation0]]
  $region129: #{tpu_custom_call.1} parent=0
    _
  %s23 = ssub.s32 1, %s21
  %s24 = scalar_select 0, %s23, %s21
  $region1: #{tpu_custom_call.1} parent=0
    #allocation3 [shape = 'u8[512]{0}', space=vmem, size = 0x400, scoped, tag = 'input window, operand 2, single buffered']
    #allocation4 [shape = 's32[2]{0}', space=sflag, size = 0x8, scoped, tag = 'scoped memory for tpu_custom_call.1']
    #allocation5 [shape = 'u8[512]{0}', space=vmem, size = 0x400, scoped, tag = 'input window, operand 3, single buffered']
    #allocation6 [shape = 's32[1]{0}', space=sflag, size = 0x4, scoped, tag = 'scoped memory for tpu_custom_call.1']
    %25 = vsyncpa [#allocation4], 0
    %26 = vsyncpa [#allocation6], 0
    loop: start=0, step=1, limit=6
    $region2: #{tpu_custom_call.1} parent=1 // loop_pre_header
      _
    $region3: #{tpu_custom_call.1} parent=1 // loop_header
      %s28 = sphi 0, %s32
      %p29 = scmp.ge.s32.totalorder %s28, 6
      %s35 = sphi 0, %s47
      %s36 = sphi 0, %s43
      %s37 = sphi 0, %s35
      %s38 = sphi 0, %s36
      %s39 = sphi 0, %s37
      %s40 = sphi 0, %s38
      %s50 = sphi 0, %s52
      %s53 = sphi 0, %s50
      %s54 = sphi 0, %s53
      %s70 = sphi 0, %s54
      %s76 = sphi 0, %s78
      %s79 = sphi 0, %s76
      %s80 = sphi 0, %s79
      %s96 = sphi 0, %s80
      %s100 = sphi 0, %s100
      %s102 = sphi 0, %s100
      %s103 = sphi 0, %s102
      %s117 = sphi 0, %s103
      %s121 = sphi 0, %s121
      %s123 = sphi 0, %s121
      %s124 = sphi 0, %s123
      %s138 = sphi 0, %s124
      %s144 = sphi 0, %s146
      %s147 = sphi 0, %s144
      %s148 = sphi 0, %s147
      %s164 = sphi 0, %s148
      %s170 = sphi 0, %s172
      %s173 = sphi 0, %s170
      %s174 = sphi 0, %s173
      %s190 = sphi 0, %s174
      %s196 = sphi 0, %s198
      %s199 = sphi 0, %s196
      %s200 = sphi 0, %s199
      %s216 = sphi 0, %s200
      %s222 = sphi 0, %s224
      %s225 = sphi 0, %s222
      %s226 = sphi 0, %s225
      %s242 = sphi 0, %s226
      %s248 = sphi 0, %s250
      %s251 = sphi 0, %s248
      %s252 = sphi 0, %s251
      %s268 = sphi 0, %s252
      %s274 = sphi 0, %s276
      %s277 = sphi 0, %s274
      %s278 = sphi 0, %s277
      %s294 = sphi 0, %s278
      %s300 = sphi 0, %s302
      %s303 = sphi 0, %s300
      %s304 = sphi 0, %s303
      %s320 = sphi 0, %s304
      %s326 = sphi 0, %s328
      %s329 = sphi 0, %s326
      %s330 = sphi 0, %s329
      %s346 = sphi 0, %s330
      %s352 = sphi 0, %s354
      %s355 = sphi 0, %s352
      %s356 = sphi 0, %s355
      %s372 = sphi 0, %s356
      %s378 = sphi 0, %s380
      %s381 = sphi 0, %s378
      %s382 = sphi 0, %s381
      %s398 = sphi 0, %s382
      %s404 = sphi 0, %s406
      %s407 = sphi 0, %s404
      %s408 = sphi 0, %s407
      %s424 = sphi 0, %s408
      %s430 = sphi 0, %s432
      %s433 = sphi 0, %s430
      %s434 = sphi 0, %s433
      %s450 = sphi 0, %s434
      %s454 = sphi 0, %s454
      %s456 = sphi 0, %s454
      %s457 = sphi 0, %s456
      %s471 = sphi 0, %s457
      %s475 = sphi 0, %s475
      %s477 = sphi 0, %s475
      %s478 = sphi 0, %s477
      %s492 = sphi 0, %s478
      %s496 = sphi 0, %s496
      %s498 = sphi 0, %s496
      %s499 = sphi 0, %s498
      %s513 = sphi 0, %s499
      %s517 = sphi 0, %s517
      %s519 = sphi 0, %s517
      %s520 = sphi 0, %s519
      %s534 = sphi 0, %s520
      %s540 = sphi 0, %s542
      %s543 = sphi 0, %s540
      %s544 = sphi 0, %s543
      %s560 = sphi 0, %s544
    $region4: #{tpu_custom_call.1} parent=1 // loop_header_branch
      %31 = sbr.rel (%p29) target = $region8
    $region5: #{tpu_custom_call.1} parent=1 // loop_body
      %s33 = ssub.s32 %s28, 1
      %s34 = ssub.s32 %s28, 2
      %s41 = sadd.s32 1, %s36
      %p42 = scmp.ge.s32.totalorder %s41, 2
      %s43 = scalar_select %p42, 0, %s41
      %s44 = sadd.s32 1, %s35
      %s45 = scalar_select %p42, %s44, %s35
      %p46 = scmp.ge.s32.totalorder %s45, 2
      %s47 = scalar_select %p46, 0, %s45
      %s48 = ssub.s32 %s35, %s47
      %p49 = scmp.eq.s32.totalorder %s48, 0
      %s51 = sadd.s32 %s50, 1
      %s52 = scalar_select %p49, %s50, %s51
      %p55 = pneg %p49
      %p56 = scmp.eq.s32.totalorder %s28, 3
      %p57 = por %p55, %p56
      %p58 = scmp.ne.s32.totalorder %s50, %s53
      %p59 = scmp.eq.s32.totalorder %s28, 0
      %p60 = por %p58, %p59
      %p61 = scmp.ne.s32.totalorder %s50, %s53
      %p62 = scmp.eq.s32.totalorder %s33, 3
      %p63 = por %p61, %p62
      %p64 = scmp.ne.s32.totalorder %s53, %s54
      %p65 = scmp.eq.s32.totalorder %s33, 0
      %p66 = por %p64, %p65
      %p67 = scmp.ne.s32.totalorder %s53, %s54
      %p68 = scmp.eq.s32.totalorder %s34, 3
      %p69 = por %p67, %p68
      %p71 = scmp.ne.s32.totalorder %s54, %s70
      %p72 = scmp.eq.s32.totalorder %s34, 0
      %p73 = por %p71, %p72
      %s74 = ssub.s32 %s35, %s47
      %p75 = scmp.eq.s32.totalorder %s74, 0
      %s77 = sadd.s32 %s76, 1
      %s78 = scalar_select %p75, %s76, %s77
      %p81 = pneg %p75
      %p82 = scmp.eq.s32.totalorder %s28, 3
      %p83 = por %p81, %p82
      %p84 = scmp.ne.s32.totalorder %s76, %s79
      %p85 = scmp.eq.s32.totalorder %s28, 0
      %p86 = por %p84, %p85
      %p87 = scmp.ne.s32.totalorder %s76, %s79
      %p88 = scmp.eq.s32.totalorder %s33, 3
      %p89 = por %p87, %p88
      %p90 = scmp.ne.s32.totalorder %s79, %s80
      %p91 = scmp.eq.s32.totalorder %s33, 0
      %p92 = por %p90, %p91
      %p93 = scmp.ne.s32.totalorder %s79, %s80
      %p94 = scmp.eq.s32.totalorder %s34, 3
      %p95 = por %p93, %p94
      %p97 = scmp.ne.s32.totalorder %s80, %s96
      %p98 = scmp.eq.s32.totalorder %s34, 0
      %p99 = por %p97, %p98
      %s101 = sadd.s32 %s100, 1
      %p104 = scmp.eq.s32.totalorder %s28, 3
      %p105 = scmp.ne.s32.totalorder %s100, %s102
      %p106 = scmp.eq.s32.totalorder %s28, 0
      %p107 = por %p105, %p106
      %p108 = scmp.ne.s32.totalorder %s100, %s102
      %p109 = scmp.eq.s32.totalorder %s33, 3
      %p110 = por %p108, %p109
      %p111 = scmp.ne.s32.totalorder %s102, %s103
      %p112 = scmp.eq.s32.totalorder %s33, 0
      %p113 = por %p111, %p112
      %p114 = scmp.ne.s32.totalorder %s102, %s103
      %p115 = scmp.eq.s32.totalorder %s34, 3
      %p116 = por %p114, %p115
      %p118 = scmp.ne.s32.totalorder %s103, %s117
      %p119 = scmp.eq.s32.totalorder %s34, 0
      %p120 = por %p118, %p119
      %s122 = sadd.s32 %s121, 1
      %p125 = scmp.eq.s32.totalorder %s28, 3
      %p126 = scmp.ne.s32.totalorder %s121, %s123
      %p127 = scmp.eq.s32.totalorder %s28, 0
      %p128 = por %p126, %p127
      %p129 = scmp.ne.s32.totalorder %s121, %s123
      %p130 = scmp.eq.s32.totalorder %s33, 3
      %p131 = por %p129, %p130
      %p132 = scmp.ne.s32.totalorder %s123, %s124
      %p133 = scmp.eq.s32.totalorder %s33, 0
      %p134 = por %p132, %p133
      %p135 = scmp.ne.s32.totalorder %s123, %s124
      %p136 = scmp.eq.s32.totalorder %s34, 3
      %p137 = por %p135, %p136
      %p139 = scmp.ne.s32.totalorder %s124, %s138
      %p140 = scmp.eq.s32.totalorder %s34, 0
      %p141 = por %p139, %p140
      %s142 = ssub.s32 %s36, %s43
      %p143 = scmp.eq.s32.totalorder %s142, 0
      %s145 = sadd.s32 %s144, 1
      %s146 = scalar_select %p143, %s144, %s145
      %p149 = pneg %p143
      %p150 = scmp.eq.s32.totalorder %s28, 3
      %p151 = por %p149, %p150
      %p152 = scmp.ne.s32.totalorder %s144, %s147
      %p153 = scmp.eq.s32.totalorder %s28, 0
      %p154 = por %p152, %p153
      %p155 = scmp.ne.s32.totalorder %s144, %s147
      %p156 = scmp.eq.s32.totalorder %s33, 3
      %p157 = por %p155, %p156
      %p158 = scmp.ne.s32.totalorder %s147, %s148
      %p159 = scmp.eq.s32.totalorder %s33, 0
      %p160 = por %p158, %p159
      %p161 = scmp.ne.s32.totalorder %s147, %s148
      %p162 = scmp.eq.s32.totalorder %s34, 3
      %p163 = por %p161, %p162
      %p165 = scmp.ne.s32.totalorder %s148, %s164
      %p166 = scmp.eq.s32.totalorder %s34, 0
      %p167 = por %p165, %p166
      %s168 = ssub.s32 %s36, %s43
      %p169 = scmp.eq.s32.totalorder %s168, 0
      %s171 = sadd.s32 %s170, 1
      %s172 = scalar_select %p169, %s170, %s171
      %p175 = pneg %p169
      %p176 = scmp.eq.s32.totalorder %s28, 3
      %p177 = por %p175, %p176
      %p178 = scmp.ne.s32.totalorder %s170, %s173
      %p179 = scmp.eq.s32.totalorder %s28, 0
      %p180 = por %p178, %p179
      %p181 = scmp.ne.s32.totalorder %s170, %s173
      %p182 = scmp.eq.s32.totalorder %s33, 3
      %p183 = por %p181, %p182
      %p184 = scmp.ne.s32.totalorder %s173, %s174
      %p185 = scmp.eq.s32.totalorder %s33, 0
      %p186 = por %p184, %p185
      %p187 = scmp.ne.s32.totalorder %s173, %s174
      %p188 = scmp.eq.s32.totalorder %s34, 3
      %p189 = por %p187, %p188
      %p191 = scmp.ne.s32.totalorder %s174, %s190
      %p192 = scmp.eq.s32.totalorder %s34, 0
      %p193 = por %p191, %p192
      %s194 = ssub.s32 %s36, %s43
      %p195 = scmp.eq.s32.totalorder %s194, 0
      %s197 = sadd.s32 %s196, 1
      %s198 = scalar_select %p195, %s196, %s197
      %p201 = pneg %p195
      %p202 = scmp.eq.s32.totalorder %s28, 3
      %p203 = por %p201, %p202
      %p204 = scmp.ne.s32.totalorder %s196, %s199
      %p205 = scmp.eq.s32.totalorder %s28, 0
      %p206 = por %p204, %p205
      %p207 = scmp.ne.s32.totalorder %s196, %s199
      %p208 = scmp.eq.s32.totalorder %s33, 3
      %p209 = por %p207, %p208
      %p210 = scmp.ne.s32.totalorder %s199, %s200
      %p211 = scmp.eq.s32.totalorder %s33, 0
      %p212 = por %p210, %p211
      %p213 = scmp.ne.s32.totalorder %s199, %s200
      %p214 = scmp.eq.s32.totalorder %s34, 3
      %p215 = por %p213, %p214
      %p217 = scmp.ne.s32.totalorder %s200, %s216
      %p218 = scmp.eq.s32.totalorder %s34, 0
      %p219 = por %p217, %p218
      %s220 = ssub.s32 %s36, %s43
      %p221 = scmp.eq.s32.totalorder %s220, 0
      %s223 = sadd.s32 %s222, 1
      %s224 = scalar_select %p221, %s222, %s223
      %p227 = pneg %p221
      %p228 = scmp.eq.s32.totalorder %s28, 3
      %p229 = por %p227, %p228
      %p230 = scmp.ne.s32.totalorder %s222, %s225
      %p231 = scmp.eq.s32.totalorder %s28, 0
      %p232 = por %p230, %p231
      %p233 = scmp.ne.s32.totalorder %s222, %s225
      %p234 = scmp.eq.s32.totalorder %s33, 3
      %p235 = por %p233, %p234
      %p236 = scmp.ne.s32.totalorder %s225, %s226
      %p237 = scmp.eq.s32.totalorder %s33, 0
      %p238 = por %p236, %p237
      %p239 = scmp.ne.s32.totalorder %s225, %s226
      %p240 = scmp.eq.s32.totalorder %s34, 3
      %p241 = por %p239, %p240
      %p243 = scmp.ne.s32.totalorder %s226, %s242
      %p244 = scmp.eq.s32.totalorder %s34, 0
      %p245 = por %p243, %p244
      %s246 = ssub.s32 %s36, %s43
      %p247 = scmp.eq.s32.totalorder %s246, 0
      %s249 = sadd.s32 %s248, 1
      %s250 = scalar_select %p247, %s248, %s249
      %p253 = pneg %p247
      %p254 = scmp.eq.s32.totalorder %s28, 3
      %p255 = por %p253, %p254
      %p256 = scmp.ne.s32.totalorder %s248, %s251
      %p257 = scmp.eq.s32.totalorder %s28, 0
      %p258 = por %p256, %p257
      %p259 = scmp.ne.s32.totalorder %s248, %s251
      %p260 = scmp.eq.s32.totalorder %s33, 3
      %p261 = por %p259, %p260
      %p262 = scmp.ne.s32.totalorder %s251, %s252
      %p263 = scmp.eq.s32.totalorder %s33, 0
      %p264 = por %p262, %p263
      %p265 = scmp.ne.s32.totalorder %s251, %s252
      %p266 = scmp.eq.s32.totalorder %s34, 3
      %p267 = por %p265, %p266
      %p269 = scmp.ne.s32.totalorder %s252, %s268
      %p270 = scmp.eq.s32.totalorder %s34, 0
      %p271 = por %p269, %p270
      %s272 = ssub.s32 %s36, %s43
      %p273 = scmp.eq.s32.totalorder %s272, 0
      %s275 = sadd.s32 %s274, 1
      %s276 = scalar_select %p273, %s274, %s275
      %p279 = pneg %p273
      %p280 = scmp.eq.s32.totalorder %s28, 3
      %p281 = por %p279, %p280
      %p282 = scmp.ne.s32.totalorder %s274, %s277
      %p283 = scmp.eq.s32.totalorder %s28, 0
      %p284 = por %p282, %p283
      %p285 = scmp.ne.s32.totalorder %s274, %s277
      %p286 = scmp.eq.s32.totalorder %s33, 3
      %p287 = por %p285, %p286
      %p288 = scmp.ne.s32.totalorder %s277, %s278
      %p289 = scmp.eq.s32.totalorder %s33, 0
      %p290 = por %p288, %p289
      %p291 = scmp.ne.s32.totalorder %s277, %s278
      %p292 = scmp.eq.s32.totalorder %s34, 3
      %p293 = por %p291, %p292
      %p295 = scmp.ne.s32.totalorder %s278, %s294
      %p296 = scmp.eq.s32.totalorder %s34, 0
      %p297 = por %p295, %p296
      %s298 = ssub.s32 %s36, %s43
      %p299 = scmp.eq.s32.totalorder %s298, 0
      %s301 = sadd.s32 %s300, 1
      %s302 = scalar_select %p299, %s300, %s301
      %p305 = pneg %p299
      %p306 = scmp.eq.s32.totalorder %s28, 3
      %p307 = por %p305, %p306
      %p308 = scmp.ne.s32.totalorder %s300, %s303
      %p309 = scmp.eq.s32.totalorder %s28, 0
      %p310 = por %p308, %p309
      %p311 = scmp.ne.s32.totalorder %s300, %s303
      %p312 = scmp.eq.s32.totalorder %s33, 3
      %p313 = por %p311, %p312
      %p314 = scmp.ne.s32.totalorder %s303, %s304
      %p315 = scmp.eq.s32.totalorder %s33, 0
      %p316 = por %p314, %p315
      %p317 = scmp.ne.s32.totalorder %s303, %s304
      %p318 = scmp.eq.s32.totalorder %s34, 3
      %p319 = por %p317, %p318
      %p321 = scmp.ne.s32.totalorder %s304, %s320
      %p322 = scmp.eq.s32.totalorder %s34, 0
      %p323 = por %p321, %p322
      %s324 = ssub.s32 %s36, %s43
      %p325 = scmp.eq.s32.totalorder %s324, 0
      %s327 = sadd.s32 %s326, 1
      %s328 = scalar_select %p325, %s326, %s327
      %p331 = pneg %p325
      %p332 = scmp.eq.s32.totalorder %s28, 3
      %p333 = por %p331, %p332
      %p334 = scmp.ne.s32.totalorder %s326, %s329
      %p335 = scmp.eq.s32.totalorder %s28, 0
      %p336 = por %p334, %p335
      %p337 = scmp.ne.s32.totalorder %s326, %s329
      %p338 = scmp.eq.s32.totalorder %s33, 3
      %p339 = por %p337, %p338
      %p340 = scmp.ne.s32.totalorder %s329, %s330
      %p341 = scmp.eq.s32.totalorder %s33, 0
      %p342 = por %p340, %p341
      %p343 = scmp.ne.s32.totalorder %s329, %s330
      %p344 = scmp.eq.s32.totalorder %s34, 3
      %p345 = por %p343, %p344
      %p347 = scmp.ne.s32.totalorder %s330, %s346
      %p348 = scmp.eq.s32.totalorder %s34, 0
      %p349 = por %p347, %p348
      %s350 = ssub.s32 %s36, %s43
      %p351 = scmp.eq.s32.totalorder %s350, 0
      %s353 = sadd.s32 %s352, 1
      %s354 = scalar_select %p351, %s352, %s353
      %p357 = pneg %p351
      %p358 = scmp.eq.s32.totalorder %s28, 3
      %p359 = por %p357, %p358
      %p360 = scmp.ne.s32.totalorder %s352, %s355
      %p361 = scmp.eq.s32.totalorder %s28, 0
      %p362 = por %p360, %p361
      %p363 = scmp.ne.s32.totalorder %s352, %s355
      %p364 = scmp.eq.s32.totalorder %s33, 3
      %p365 = por %p363, %p364
      %p366 = scmp.ne.s32.totalorder %s355, %s356
      %p367 = scmp.eq.s32.totalorder %s33, 0
      %p368 = por %p366, %p367
      %p369 = scmp.ne.s32.totalorder %s355, %s356
      %p370 = scmp.eq.s32.totalorder %s34, 3
      %p371 = por %p369, %p370
      %p373 = scmp.ne.s32.totalorder %s356, %s372
      %p374 = scmp.eq.s32.totalorder %s34, 0
      %p375 = por %p373, %p374
      %s376 = ssub.s32 %s36, %s43
      %p377 = scmp.eq.s32.totalorder %s376, 0
      %s379 = sadd.s32 %s378, 1
      %s380 = scalar_select %p377, %s378, %s379
      %p383 = pneg %p377
      %p384 = scmp.eq.s32.totalorder %s28, 3
      %p385 = por %p383, %p384
      %p386 = scmp.ne.s32.totalorder %s378, %s381
      %p387 = scmp.eq.s32.totalorder %s28, 0
      %p388 = por %p386, %p387
      %p389 = scmp.ne.s32.totalorder %s378, %s381
      %p390 = scmp.eq.s32.totalorder %s33, 3
      %p391 = por %p389, %p390
      %p392 = scmp.ne.s32.totalorder %s381, %s382
      %p393 = scmp.eq.s32.totalorder %s33, 0
      %p394 = por %p392, %p393
      %p395 = scmp.ne.s32.totalorder %s381, %s382
      %p396 = scmp.eq.s32.totalorder %s34, 3
      %p397 = por %p395, %p396
      %p399 = scmp.ne.s32.totalorder %s382, %s398
      %p400 = scmp.eq.s32.totalorder %s34, 0
      %p401 = por %p399, %p400
      %s402 = ssub.s32 %s36, %s43
      %p403 = scmp.eq.s32.totalorder %s402, 0
      %s405 = sadd.s32 %s404, 1
      %s406 = scalar_select %p403, %s404, %s405
      %p409 = pneg %p403
      %p410 = scmp.eq.s32.totalorder %s28, 3
      %p411 = por %p409, %p410
      %p412 = scmp.ne.s32.totalorder %s404, %s407
      %p413 = scmp.eq.s32.totalorder %s28, 0
      %p414 = por %p412, %p413
      %p415 = scmp.ne.s32.totalorder %s404, %s407
      %p416 = scmp.eq.s32.totalorder %s33, 3
      %p417 = por %p415, %p416
      %p418 = scmp.ne.s32.totalorder %s407, %s408
      %p419 = scmp.eq.s32.totalorder %s33, 0
      %p420 = por %p418, %p419
      %p421 = scmp.ne.s32.totalorder %s407, %s408
      %p422 = scmp.eq.s32.totalorder %s34, 3
      %p423 = por %p421, %p422
      %p425 = scmp.ne.s32.totalorder %s408, %s424
      %p426 = scmp.eq.s32.totalorder %s34, 0
      %p427 = por %p425, %p426
      %s428 = ssub.s32 %s36, %s43
      %p429 = scmp.eq.s32.totalorder %s428, 0
      %s431 = sadd.s32 %s430, 1
      %s432 = scalar_select %p429, %s430, %s431
      %p435 = pneg %p429
      %p436 = scmp.eq.s32.totalorder %s28, 3
      %p437 = por %p435, %p436
      %p438 = scmp.ne.s32.totalorder %s430, %s433
      %p439 = scmp.eq.s32.totalorder %s28, 0
      %p440 = por %p438, %p439
      %p441 = scmp.ne.s32.totalorder %s430, %s433
      %p442 = scmp.eq.s32.totalorder %s33, 3
      %p443 = por %p441, %p442
      %p444 = scmp.ne.s32.totalorder %s433, %s434
      %p445 = scmp.eq.s32.totalorder %s33, 0
      %p446 = por %p444, %p445
      %p447 = scmp.ne.s32.totalorder %s433, %s434
      %p448 = scmp.eq.s32.totalorder %s34, 3
      %p449 = por %p447, %p448
      %p451 = scmp.ne.s32.totalorder %s434, %s450
      %p452 = scmp.eq.s32.totalorder %s34, 0
      %p453 = por %p451, %p452
      %s455 = sadd.s32 %s454, 1
      %p458 = scmp.eq.s32.totalorder %s28, 3
      %p459 = scmp.ne.s32.totalorder %s454, %s456
      %p460 = scmp.eq.s32.totalorder %s28, 0
      %p461 = por %p459, %p460
      %p462 = scmp.ne.s32.totalorder %s454, %s456
      %p463 = scmp.eq.s32.totalorder %s33, 3
      %p464 = por %p462, %p463
      %p465 = scmp.ne.s32.totalorder %s456, %s457
      %p466 = scmp.eq.s32.totalorder %s33, 0
      %p467 = por %p465, %p466
      %p468 = scmp.ne.s32.totalorder %s456, %s457
      %p469 = scmp.eq.s32.totalorder %s34, 3
      %p470 = por %p468, %p469
      %p472 = scmp.ne.s32.totalorder %s457, %s471
      %p473 = scmp.eq.s32.totalorder %s34, 0
      %p474 = por %p472, %p473
      %s476 = sadd.s32 %s475, 1
      %p479 = scmp.eq.s32.totalorder %s28, 3
      %p480 = scmp.ne.s32.totalorder %s475, %s477
      %p481 = scmp.eq.s32.totalorder %s28, 0
      %p482 = por %p480, %p481
      %p483 = scmp.ne.s32.totalorder %s475, %s477
      %p484 = scmp.eq.s32.totalorder %s33, 3
      %p485 = por %p483, %p484
      %p486 = scmp.ne.s32.totalorder %s477, %s478
      %p487 = scmp.eq.s32.totalorder %s33, 0
      %p488 = por %p486, %p487
      %p489 = scmp.ne.s32.totalorder %s477, %s478
      %p490 = scmp.eq.s32.totalorder %s34, 3
      %p491 = por %p489, %p490
      %p493 = scmp.ne.s32.totalorder %s478, %s492
      %p494 = scmp.eq.s32.totalorder %s34, 0
      %p495 = por %p493, %p494
      %s497 = sadd.s32 %s496, 1
      %p500 = scmp.eq.s32.totalorder %s28, 3
      %p501 = scmp.ne.s32.totalorder %s496, %s498
      %p502 = scmp.eq.s32.totalorder %s28, 0
      %p503 = por %p501, %p502
      %p504 = scmp.ne.s32.totalorder %s496, %s498
      %p505 = scmp.eq.s32.totalorder %s33, 3
      %p506 = por %p504, %p505
      %p507 = scmp.ne.s32.totalorder %s498, %s499
      %p508 = scmp.eq.s32.totalorder %s33, 0
      %p509 = por %p507, %p508
      %p510 = scmp.ne.s32.totalorder %s498, %s499
      %p511 = scmp.eq.s32.totalorder %s34, 3
      %p512 = por %p510, %p511
      %p514 = scmp.ne.s32.totalorder %s499, %s513
      %p515 = scmp.eq.s32.totalorder %s34, 0
      %p516 = por %p514, %p515
      %s518 = sadd.s32 %s517, 1
      %p521 = scmp.eq.s32.totalorder %s28, 3
      %p522 = scmp.ne.s32.totalorder %s517, %s519
      %p523 = scmp.eq.s32.totalorder %s28, 0
      %p524 = por %p522, %p523
      %p525 = scmp.ne.s32.totalorder %s517, %s519
      %p526 = scmp.eq.s32.totalorder %s33, 3
      %p527 = por %p525, %p526
      %p528 = scmp.ne.s32.totalorder %s519, %s520
      %p529 = scmp.eq.s32.totalorder %s33, 0
      %p530 = por %p528, %p529
      %p531 = scmp.ne.s32.totalorder %s519, %s520
      %p532 = scmp.eq.s32.totalorder %s34, 3
      %p533 = por %p531, %p532
      %p535 = scmp.ne.s32.totalorder %s520, %s534
      %p536 = scmp.eq.s32.totalorder %s34, 0
      %p537 = por %p535, %p536
      %s538 = ssub.s32 %s35, %s47
      %p539 = scmp.eq.s32.totalorder %s538, 0
      %s541 = sadd.s32 %s540, 1
      %s542 = scalar_select %p539, %s540, %s541
      %p545 = pneg %p539
      %p546 = scmp.eq.s32.totalorder %s28, 3
      %p547 = por %p545, %p546
      %p548 = scmp.ne.s32.totalorder %s540, %s543
      %p549 = scmp.eq.s32.totalorder %s28, 0
      %p550 = por %p548, %p549
      %p551 = scmp.ne.s32.totalorder %s540, %s543
      %p552 = scmp.eq.s32.totalorder %s33, 3
      %p553 = por %p551, %p552
      %p554 = scmp.ne.s32.totalorder %s543, %s544
      %p555 = scmp.eq.s32.totalorder %s33, 0
      %p556 = por %p554, %p555
      %p557 = scmp.ne.s32.totalorder %s543, %s544
      %p558 = scmp.eq.s32.totalorder %s34, 3
      %p559 = por %p557, %p558
      %p561 = scmp.ne.s32.totalorder %s544, %s560
      %p562 = scmp.eq.s32.totalorder %s34, 0
      %p563 = por %p561, %p562
      %p564 = scmp.le.s32.totalorder 1, %s28
      %p565 = scmp.lt.s32.totalorder %s28, 5
      %p566 = pnand %p564, %p565
      %p567 = pneg %p566
      // Predicated region
      $region9: #{tpu_custom_call.1} parent=5 // pred_check
        _
      $region10: #{tpu_custom_call.1} parent=5 // pred_check_branch
        %569 = sbr.rel (%p566) target = $region12
      $region11: #{tpu_custom_call.1} parent=5 // pred_region
        %s570 = ssub.s32 %s28, 1
        // Predicated region
        $region13: #{tpu_custom_call.1} parent=11 // pred_check
          %p571 = pneg %p113
        $region14: #{tpu_custom_call.1} parent=11 // pred_check_branch
          %573 = sbr.rel (%p571) target = $region16
        $region15: #{tpu_custom_call.1} parent=11 // pred_region
          %s575 = ssub.s32 16, 16
          %576 = vsyncadd [#allocation4], %s575
          %s578 = sshll.u32 [#allocation3], 4
          %s579 = int_to_ptr.vmem [resolvable:$true] %s578
          %581 = dma.hbm_to_vmem [thread:$0]  %s2, 16, %s579, [#allocation4]
        $region16: #{tpu_custom_call.1} parent=11 // pred_fallthru
          _
        // Predicated region
        $region17: #{tpu_custom_call.1} parent=11 // pred_check
          %p582 = pneg %p134
        $region18: #{tpu_custom_call.1} parent=11 // pred_check_branch
          %584 = sbr.rel (%p582) target = $region20
        $region19: #{tpu_custom_call.1} parent=11 // pred_region
          %s586 = ssub.s32 16, 16
          %587 = vsyncadd [#allocation6], %s586
          %s589 = sshll.u32 [#allocation5], 4
          %s590 = int_to_ptr.vmem [resolvable:$true] %s589
          %592 = dma.hbm_to_vmem [thread:$0]  %s3, 16, %s590, [#allocation6]
        $region20: #{tpu_custom_call.1} parent=11 // pred_fallthru
          _
        // Predicated region
        $region21: #{tpu_custom_call.1} parent=11 // pred_check
          %p593 = pneg %p467
        $region22: #{tpu_custom_call.1} parent=11 // pred_check_branch
          %595 = sbr.rel (%p593) target = $region24
        $region23: #{tpu_custom_call.1} parent=11 // pred_region
          _
        $region24: #{tpu_custom_call.1} parent=11 // pred_fallthru
          _
        // Predicated region
        $region25: #{tpu_custom_call.1} parent=11 // pred_check
          %p596 = pneg %p488
        $region26: #{tpu_custom_call.1} parent=11 // pred_check_branch
          %598 = sbr.rel (%p596) target = $region28
        $region27: #{tpu_custom_call.1} parent=11 // pred_region
          _
        $region28: #{tpu_custom_call.1} parent=11 // pred_fallthru
          _
        // Predicated region
        $region29: #{tpu_custom_call.1} parent=11 // pred_check
          %p599 = pneg %p509
        $region30: #{tpu_custom_call.1} parent=11 // pred_check_branch
          %601 = sbr.rel (%p599) target = $region32
        $region31: #{tpu_custom_call.1} parent=11 // pred_region
          _
        $region32: #{tpu_custom_call.1} parent=11 // pred_fallthru
          _
        // Predicated region
        $region33: #{tpu_custom_call.1} parent=11 // pred_check
          %p602 = pneg %p530
        $region34: #{tpu_custom_call.1} parent=11 // pred_check_branch
          %604 = sbr.rel (%p602) target = $region36
        $region35: #{tpu_custom_call.1} parent=11 // pred_region
          _
        $region36: #{tpu_custom_call.1} parent=11 // pred_fallthru
          _
      $region12: #{tpu_custom_call.1} parent=5 // pred_fallthru
        _
      %p605 = scmp.lt.s32.totalorder %s28, 4
      // Predicated region
      $region37: #{tpu_custom_call.1} parent=5 // pred_check
        %p606 = pneg %p605
      $region38: #{tpu_custom_call.1} parent=5 // pred_check_branch
        %608 = sbr.rel (%p606) target = $region40
      $region39: #{tpu_custom_call.1} parent=5 // pred_region
        // Predicated region
        $region41: #{tpu_custom_call.1} parent=39 // pred_check
          %p609 = pneg %p60
        $region42: #{tpu_custom_call.1} parent=39 // pred_check_branch
          %611 = sbr.rel (%p609) target = $region44
        $region43: #{tpu_custom_call.1} parent=39 // pred_region
          %p612 = scmp.lt.s32.totalorder %s35, 1
          %s613 = scalar_select %p612, %s35, 1
          %s614 = smul.addr %s613, 8
          %s615 = scalar_lea.vmem %s0, %s614
        $region44: #{tpu_custom_call.1} parent=39 // pred_fallthru
          _
        // Predicated region
        $region45: #{tpu_custom_call.1} parent=39 // pred_check
          %p616 = pneg %p86
        $region46: #{tpu_custom_call.1} parent=39 // pred_check_branch
          %618 = sbr.rel (%p616) target = $region48
        $region47: #{tpu_custom_call.1} parent=39 // pred_region
          %p619 = scmp.lt.s32.totalorder %s35, 1
          %s620 = scalar_select %p619, %s35, 1
          %s621 = scalar_lea.vmem %s1, %s620
        $region48: #{tpu_custom_call.1} parent=39 // pred_fallthru
          _
        // Predicated region
        $region49: #{tpu_custom_call.1} parent=39 // pred_check
          %p622 = pneg %p154
        $region50: #{tpu_custom_call.1} parent=39 // pred_check_branch
          %624 = sbr.rel (%p622) target = $region52
        $region51: #{tpu_custom_call.1} parent=39 // pred_region
          %p625 = scmp.lt.s32.totalorder %s36, 1
          %s626 = scalar_select %p625, %s36, 1
          %s627 = smul.addr %s626, 4
          %s628 = smul.addr %s627, 4
          %s629 = scalar_lea.vmem %s4, %s628
        $region52: #{tpu_custom_call.1} parent=39 // pred_fallthru
          _
        // Predicated region
        $region53: #{tpu_custom_call.1} parent=39 // pred_check
          %p630 = pneg %p180
        $region54: #{tpu_custom_call.1} parent=39 // pred_check_branch
          %632 = sbr.rel (%p630) target = $region56
        $region55: #{tpu_custom_call.1} parent=39 // pred_region
          %p633 = scmp.lt.s32.totalorder %s36, 1
          %s634 = scalar_select %p633, %s36, 1
          %s635 = scalar_lea.vmem %s5, %s634
        $region56: #{tpu_custom_call.1} parent=39 // pred_fallthru
          _
        // Predicated region
        $region57: #{tpu_custom_call.1} parent=39 // pred_check
          %p636 = pneg %p206
        $region58: #{tpu_custom_call.1} parent=39 // pred_check_branch
          %638 = sbr.rel (%p636) target = $region60
        $region59: #{tpu_custom_call.1} parent=39 // pred_region
          %p639 = scmp.lt.s32.totalorder %s36, 1
          %s640 = scalar_select %p639, %s36, 1
          %s641 = smul.addr %s640, 4
          %s642 = smul.addr %s641, 4
          %s643 = scalar_lea.vmem %s6, %s642
        $region60: #{tpu_custom_call.1} parent=39 // pred_fallthru
          _
        // Predicated region
        $region61: #{tpu_custom_call.1} parent=39 // pred_check
          %p644 = pneg %p232
        $region62: #{tpu_custom_call.1} parent=39 // pred_check_branch
          %646 = sbr.rel (%p644) target = $region64
        $region63: #{tpu_custom_call.1} parent=39 // pred_region
          %p647 = scmp.lt.s32.totalorder %s36, 1
          %s648 = scalar_select %p647, %s36, 1
          %s649 = scalar_lea.vmem %s7, %s648
        $region64: #{tpu_custom_call.1} parent=39 // pred_fallthru
          _
        // Predicated region
        $region65: #{tpu_custom_call.1} parent=39 // pred_check
          %p650 = pneg %p258
        $region66: #{tpu_custom_call.1} parent=39 // pred_check_branch
          %652 = sbr.rel (%p650) target = $region68
        $region67: #{tpu_custom_call.1} parent=39 // pred_region
          %p653 = scmp.lt.s32.totalorder %s36, 1
          %s654 = scalar_select %p653, %s36, 1
          %s655 = scalar_lea.vmem %s8, %s654
        $region68: #{tpu_custom_call.1} parent=39 // pred_fallthru
          _
        // Predicated region
        $region69: #{tpu_custom_call.1} parent=39 // pred_check
          %p656 = pneg %p284
        $region70: #{tpu_custom_call.1} parent=39 // pred_check_branch
          %658 = sbr.rel (%p656) target = $region72
        $region71: #{tpu_custom_call.1} parent=39 // pred_region
          %p659 = scmp.lt.s32.totalorder %s36, 1
          %s660 = scalar_select %p659, %s36, 1
          %s661 = scalar_lea.vmem %s9, %s660
        $region72: #{tpu_custom_call.1} parent=39 // pred_fallthru
          _
        // Predicated region
        $region73: #{tpu_custom_call.1} parent=39 // pred_check
          %p662 = pneg %p310
        $region74: #{tpu_custom_call.1} parent=39 // pred_check_branch
          %664 = sbr.rel (%p662) target = $region76
        $region75: #{tpu_custom_call.1} parent=39 // pred_region
          %p665 = scmp.lt.s32.totalorder %s36, 1
          %s666 = scalar_select %p665, %s36, 1
          %s667 = smul.addr %s666, 4
          %s668 = smul.addr %s667, 4
          %s669 = scalar_lea.vmem %s10, %s668
        $region76: #{tpu_custom_call.1} parent=39 // pred_fallthru
          _
        // Predicated region
        $region77: #{tpu_custom_call.1} parent=39 // pred_check
          %p670 = pneg %p336
        $region78: #{tpu_custom_call.1} parent=39 // pred_check_branch
          %672 = sbr.rel (%p670) target = $region80
        $region79: #{tpu_custom_call.1} parent=39 // pred_region
          %p673 = scmp.lt.s32.totalorder %s36, 1
          %s674 = scalar_select %p673, %s36, 1
          %s675 = scalar_lea.vmem %s11, %s674
        $region80: #{tpu_custom_call.1} parent=39 // pred_fallthru
          _
        // Predicated region
        $region81: #{tpu_custom_call.1} parent=39 // pred_check
          %p676 = pneg %p362
        $region82: #{tpu_custom_call.1} parent=39 // pred_check_branch
          %678 = sbr.rel (%p676) target = $region84
        $region83: #{tpu_custom_call.1} parent=39 // pred_region
          %p679 = scmp.lt.s32.totalorder %s36, 1
          %s680 = scalar_select %p679, %s36, 1
          %s681 = smul.addr %s680, 8
          %s682 = smul.addr %s681, 4
          %s683 = scalar_lea.vmem %s12, %s682
        $region84: #{tpu_custom_call.1} parent=39 // pred_fallthru
          _
        // Predicated region
        $region85: #{tpu_custom_call.1} parent=39 // pred_check
          %p684 = pneg %p388
        $region86: #{tpu_custom_call.1} parent=39 // pred_check_branch
          %686 = sbr.rel (%p684) target = $region88
        $region87: #{tpu_custom_call.1} parent=39 // pred_region
          %p687 = scmp.lt.s32.totalorder %s36, 1
          %s688 = scalar_select %p687, %s36, 1
          %s689 = scalar_lea.vmem %s13, %s688
        $region88: #{tpu_custom_call.1} parent=39 // pred_fallthru
          _
        // Predicated region
        $region89: #{tpu_custom_call.1} parent=39 // pred_check
          %p690 = pneg %p414
        $region90: #{tpu_custom_call.1} parent=39 // pred_check_branch
          %692 = sbr.rel (%p690) target = $region92
        $region91: #{tpu_custom_call.1} parent=39 // pred_region
          %p693 = scmp.lt.s32.totalorder %s36, 1
          %s694 = scalar_select %p693, %s36, 1
          %s695 = scalar_lea.vmem %s14, %s694
        $region92: #{tpu_custom_call.1} parent=39 // pred_fallthru
          _
        // Predicated region
        $region93: #{tpu_custom_call.1} parent=39 // pred_check
          %p696 = pneg %p440
        $region94: #{tpu_custom_call.1} parent=39 // pred_check_branch
          %698 = sbr.rel (%p696) target = $region96
        $region95: #{tpu_custom_call.1} parent=39 // pred_region
          %p699 = scmp.lt.s32.totalorder %s36, 1
          %s700 = scalar_select %p699, %s36, 1
          %s701 = scalar_lea.vmem %s15, %s700
        $region96: #{tpu_custom_call.1} parent=39 // pred_fallthru
          _
      $region40: #{tpu_custom_call.1} parent=5 // pred_fallthru
        _
      %p702 = scmp.le.s32.totalorder 1, %s28
      %p703 = scmp.lt.s32.totalorder %s28, 5
      %p704 = pnand %p702, %p703
      %p705 = pneg %p704
      // Predicated region
      $region97: #{tpu_custom_call.1} parent=5 // pred_check
        _
      $region98: #{tpu_custom_call.1} parent=5 // pred_check_branch
        %707 = sbr.rel (%p704) target = $region100
      $region99: #{tpu_custom_call.1} parent=5 // pred_region
        %s708 = ssub.s32 %s28, 1
        // Predicated region
        $region101: #{tpu_custom_call.1} parent=99 // pred_check
          %p709 = pneg %p113
        $region102: #{tpu_custom_call.1} parent=99 // pred_check_branch
          %711 = sbr.rel (%p709) target = $region104
        $region103: #{tpu_custom_call.1} parent=99 // pred_region
          %712 = dma.done [#allocation4], 16
        $region104: #{tpu_custom_call.1} parent=99 // pred_fallthru
          _
        // Predicated region
        $region105: #{tpu_custom_call.1} parent=99 // pred_check
          %p713 = pneg %p134
        $region106: #{tpu_custom_call.1} parent=99 // pred_check_branch
          %715 = sbr.rel (%p713) target = $region108
        $region107: #{tpu_custom_call.1} parent=99 // pred_region
          %716 = dma.done [#allocation6], 16
        $region108: #{tpu_custom_call.1} parent=99 // pred_fallthru
          _
        %p717 = scmp.lt.s32.totalorder %s37, 1
        %s718 = scalar_select %p717, %s37, 1
        %s719 = smul.addr %s718, 8
        %s720 = scalar_lea.vmem %s0, %s719
        %p721 = pneg %p66
        %p722 = pneg %p63
        %p723 = scmp.lt.s32.totalorder %s37, 1
        %s724 = scalar_select %p723, %s37, 1
        %s725 = scalar_lea.vmem %s1, %s724
        %p726 = pneg %p92
        %p727 = pneg %p89
        %p728 = pneg %p113
        %p729 = pneg %p110
        %p730 = pneg %p134
        %p731 = pneg %p131
        %p732 = scmp.lt.s32.totalorder %s38, 1
        %s733 = scalar_select %p732, %s38, 1
        %s734 = smul.addr %s733, 4
        %s735 = smul.addr %s734, 4
        %s736 = scalar_lea.vmem %s4, %s735
        %p737 = pneg %p160
        %p738 = pneg %p157
        %p739 = scmp.lt.s32.totalorder %s38, 1
        %s740 = scalar_select %p739, %s38, 1
        %s741 = scalar_lea.vmem %s5, %s740
        %p742 = pneg %p186
        %p743 = pneg %p183
        %p744 = scmp.lt.s32.totalorder %s38, 1
        %s745 = scalar_select %p744, %s38, 1
        %s746 = smul.addr %s745, 4
        %s747 = smul.addr %s746, 4
        %s748 = scalar_lea.vmem %s6, %s747
        %p749 = pneg %p212
        %p750 = pneg %p209
        %p751 = scmp.lt.s32.totalorder %s38, 1
        %s752 = scalar_select %p751, %s38, 1
        %s753 = scalar_lea.vmem %s7, %s752
        %p754 = pneg %p238
        %p755 = pneg %p235
        %p756 = scmp.lt.s32.totalorder %s38, 1
        %s757 = scalar_select %p756, %s38, 1
        %s758 = scalar_lea.vmem %s8, %s757
        %p759 = pneg %p264
        %p760 = pneg %p261
        %p761 = scmp.lt.s32.totalorder %s38, 1
        %s762 = scalar_select %p761, %s38, 1
        %s763 = scalar_lea.vmem %s9, %s762
        %p764 = pneg %p290
        %p765 = pneg %p287
        %p766 = scmp.lt.s32.totalorder %s38, 1
        %s767 = scalar_select %p766, %s38, 1
        %s768 = smul.addr %s767, 4
        %s769 = smul.addr %s768, 4
        %s770 = scalar_lea.vmem %s10, %s769
        %p771 = pneg %p316
        %p772 = pneg %p313
        %p773 = scmp.lt.s32.totalorder %s38, 1
        %s774 = scalar_select %p773, %s38, 1
        %s775 = scalar_lea.vmem %s11, %s774
        %p776 = pneg %p342
        %p777 = pneg %p339
        %p778 = scmp.lt.s32.totalorder %s38, 1
        %s779 = scalar_select %p778, %s38, 1
        %s780 = smul.addr %s779, 8
        %s781 = smul.addr %s780, 4
        %s782 = scalar_lea.vmem %s12, %s781
        %p783 = pneg %p368
        %p784 = pneg %p365
        %p785 = scmp.lt.s32.totalorder %s38, 1
        %s786 = scalar_select %p785, %s38, 1
        %s787 = scalar_lea.vmem %s13, %s786
        %p788 = pneg %p394
        %p789 = pneg %p391
        %p790 = scmp.lt.s32.totalorder %s38, 1
        %s791 = scalar_select %p790, %s38, 1
        %s792 = scalar_lea.vmem %s14, %s791
        %p793 = pneg %p420
        %p794 = pneg %p417
        %p795 = scmp.lt.s32.totalorder %s38, 1
        %s796 = scalar_select %p795, %s38, 1
        %s797 = scalar_lea.vmem %s15, %s796
        %p798 = pneg %p446
        %p799 = pneg %p443
        %p800 = pneg %p467
        %p801 = pneg %p464
        %p802 = pneg %p488
        %p803 = pneg %p485
        %p804 = pneg %p509
        %p805 = pneg %p506
        %p806 = pneg %p530
        %p807 = pneg %p527
        %p808 = pneg %p556
        %p809 = pneg %p553
        %p810 = scmp.lt.s32.totalorder %s37, 1
        %s811 = scalar_select %p810, %s37, 1
        %s812 = smul.addr %s811, 8
        %s813 = scalar_lea.vmem %s20, %s812
        %p814 = scmp.lt.s32.totalorder %s37, 1
        %s815 = scalar_select %p814, %s37, 1
        %s816 = smul.addr %s815, 8
        %s817 = scalar_lea.vmem %s0, %s816
        %p818 = scmp.lt.s32.totalorder %s37, 1
        %s819 = scalar_select %p818, %s37, 1
        %s820 = scalar_lea.vmem %s1, %s819
        %p821 = scmp.lt.s32.totalorder %s38, 1
        %s822 = scalar_select %p821, %s38, 1
        %s823 = smul.addr %s822, 4
        %s824 = smul.addr %s823, 4
        %s825 = scalar_lea.vmem %s4, %s824
        %p826 = scmp.lt.s32.totalorder %s38, 1
        %s827 = scalar_select %p826, %s38, 1
        %s828 = scalar_lea.vmem %s5, %s827
        %p829 = scmp.lt.s32.totalorder %s38, 1
        %s830 = scalar_select %p829, %s38, 1
        %s831 = smul.addr %s830, 4
        %s832 = smul.addr %s831, 4
        %s833 = scalar_lea.vmem %s6, %s832
        %p834 = scmp.lt.s32.totalorder %s38, 1
        %s835 = scalar_select %p834, %s38, 1
        %s836 = scalar_lea.vmem %s7, %s835
        %p837 = scmp.lt.s32.totalorder %s38, 1
        %s838 = scalar_select %p837, %s38, 1
        %s839 = scalar_lea.vmem %s8, %s838
        %p840 = scmp.lt.s32.totalorder %s38, 1
        %s841 = scalar_select %p840, %s38, 1
        %s842 = scalar_lea.vmem %s9, %s841
        %p843 = scmp.lt.s32.totalorder %s38, 1
        %s844 = scalar_select %p843, %s38, 1
        %s845 = smul.addr %s844, 4
        %s846 = smul.addr %s845, 4
        %s847 = scalar_lea.vmem %s10, %s846
        %p848 = scmp.lt.s32.totalorder %s38, 1
        %s849 = scalar_select %p848, %s38, 1
        %s850 = scalar_lea.vmem %s11, %s849
        %p851 = scmp.lt.s32.totalorder %s38, 1
        %s852 = scalar_select %p851, %s38, 1
        %s853 = smul.addr %s852, 8
        %s854 = smul.addr %s853, 4
        %s855 = scalar_lea.vmem %s12, %s854
        %p856 = scmp.lt.s32.totalorder %s38, 1
        %s857 = scalar_select %p856, %s38, 1
        %s858 = scalar_lea.vmem %s13, %s857
        %p859 = scmp.lt.s32.totalorder %s38, 1
        %s860 = scalar_select %p859, %s38, 1
        %s861 = scalar_lea.vmem %s14, %s860
        %p862 = scmp.lt.s32.totalorder %s38, 1
        %s863 = scalar_select %p862, %s38, 1
        %s864 = scalar_lea.vmem %s15, %s863
        %p865 = scmp.lt.s32.totalorder %s37, 1
        %s866 = scalar_select %p865, %s37, 1
        %s867 = smul.addr %s866, 8
        %s868 = scalar_lea.vmem %s20, %s867
        %p870 = scmp.eq.s32.totalorder %s38, 0
        // Predicated region
        $region109: #{tpu_custom_call.1} parent=99 // pred_check
          %p871 = pneg %p870
        $region110: #{tpu_custom_call.1} parent=99 // pred_check_branch
          %873 = sbr.rel (%p871) target = $region112
        $region111: #{tpu_custom_call.1} parent=99 // pred_region
          %v874 = vld [vmem:[%s817] sm:$0xff]
          %v875 = vld [vmem:[#allocation3] sm:$0x1]
          %v876 = vld [vmem:[#allocation5] sm:$0x1]
          %vm877 = vcmask 261120
          %v878 = vsel %vm877, %v874, 0.0
          %879 = vadd.xlane.f32.xlu0 %v878
          %v880 = vpop.xlane.xlu0 %879
          %v881 = vrcp.pop 32.0
          %v882 = vmul.f32 %v880, %v881
          %v883 = vsub.f32 %v874, %v882
          %v884 = vmul.f32 %v883, %v883
          %v885 = vsel %vm877, %v884, 0.0
          %886 = vadd.xlane.f32.xlu0 %v885
          %v887 = vpop.xlane.xlu0 %886
          %v888 = vmul.f32 %v887, %v881
          %v889 = vadd.f32 %v888, 1e-05
          %v890 = vrsqrt.pop %v889
          %v891 = vmul.f32 %v883, %v890
          %v893 = vlaneseq
          %v894 = vshrl.u32 %v893, 7
          %v895 = vsub.s32 0, %v894
          %v896 = vrot.slane %v875, %v895
          %v898 = vmul.f32 %v891, %v896
          %v900 = vlaneseq
          %v901 = vshrl.u32 %v900, 7
          %v902 = vsub.s32 0, %v901
          %v903 = vrot.slane %v876, %v902
          %v905 = vadd.f32 %v898, %v903
          %906 = vst.msk [vmem:[#allocation2] sm:$0xff] %vm877, %v905
        $region112: #{tpu_custom_call.1} parent=99 // pred_fallthru
          _
        %v907 = vld [vmem:[#allocation2] sm:$0xff]
        %v908 = vpack.c.bf16 %v907, %v907
        %v909 = vld [vmem:[%s825] sm:$0xf]
        %v910 = vld [vmem:[%s825 + $0x4] sm:$0xf]
        %v911 = vld [vmem:[%s825 + $0x8] sm:$0xf]
        %v912 = vld [vmem:[%s825 + $0xc] sm:$0xf]
        %v913 = vld [vmem:[%s828] sm:$0x1]
        %v915 = vlaneseq
        %v916 = vshrl.u32 %v915, 7
        %v917 = vsub.s32 0, %v916
        %v918 = vrot.slane %v913, %v917
        %v924 = vunpack.c.l.b16 %v909
        %v925 = vunpack.c.l.b16 %v910
        %v926 = vunpack.c.l.b16 %v911
        %v927 = vunpack.c.l.b16 %v912
        %v928 = vpack.c.b16 %v925, %v924
        %v929 = vpack.c.b16 %v927, %v926
        %vm932 = vcmask 261120
        %v934 = vsel %vm932, %v908, 0
        %936 = vmatprep.subr.bf16.mxu0 0
        %937 = vmatpush1.bf16.msra.mxu0 %v928
        %938 = vmatprep.subr.bf16.mxu0 0
        %939 = vmatpush1.bf16.msra.mxu0 %v929
        %940 = vmatprep.subr.bf16.mxu0 0
        %941 = vmatpush1.bf16.msra.mxu0 0
        %942 = vmatprep.subr.bf16.mxu0 0
        %943 = vmatpush1.bf16.msra.mxu0 0
        %944 = vmatprep.subr.bf16.mxu0 0
        %945 = vmatpush1.bf16.msra.mxu0 0
        %946 = vmatprep.subr.bf16.mxu0 0
        %947 = vmatpush1.bf16.msra.mxu0 0
        %948 = vmatprep.subr.bf16.mxu0 0
        %949 = vmatpush1.bf16.msra.mxu0 0
        %950 = vmatprep.subr.bf16.mxu0 0
        %951 = vmatpush1.bf16.msra.mxu0 0
        %952 = vmatprep.subr.bf16.mxu0 0
        %953 = vmatpush1.bf16.msra.mxu0 0
        %954 = vmatprep.subr.bf16.mxu0 0
        %955 = vmatpush1.bf16.msra.mxu0 0
        %956 = vmatprep.subr.bf16.mxu0 0
        %957 = vmatpush1.bf16.msra.mxu0 0
        %958 = vmatprep.subr.bf16.mxu0 0
        %959 = vmatpush1.bf16.msra.mxu0 0
        %960 = vmatprep.subr.bf16.mxu0 0
        %961 = vmatpush1.bf16.msra.mxu0 0
        %962 = vmatprep.subr.bf16.mxu0 0
        %963 = vmatpush1.bf16.msra.mxu0 0
        %964 = vmatprep.subr.bf16.mxu0 0
        %965 = vmatpush1.bf16.msra.mxu0 0
        %966 = vmatprep.subr.bf16.mxu0 0
        %967 = vmatpush1.bf16.msra.mxu0 0
        %968 = vmatprep.mubr.bf16.mxu0 0
        %969 = vmatmul.mubr.bf16.gmra.mrb[0].mxu0 %v934
        %v970 = vpop.f32.mrb[0].mxu0
        %v971 = vadd.f32 %v918, %v970
        %v972 = vpop.f32.mrb[0].mxu0
        %v973 = vpop.f32.mrb[0].mxu0
        %v974 = vpop.f32.mrb[0].mxu0
        %975 = vdwg.mxu0
        %977 = vrot.lane.b32.xlu0 %v971, 120
        %v978 = vpop.permute.xlu0 %977
        %980 = vrot.lane.b32.xlu0 %v971, 112
        %v981 = vpop.permute.xlu0 %980
        %983 = vrot.lane.b32.xlu0 %v971, 104
        %v984 = vpop.permute.xlu0 %983
        %v986 = vpack.c.bf16 %v971, %v971
        %v987 = vpack.c.bf16 %v978, %v978
        %v988 = vpack.c.bf16 %v981, %v981
        %v989 = vpack.c.bf16 %v984, %v984
        %v990 = vld [vmem:[%s820] sm:$0x1]
        %v992 = vlaneseq
        %v993 = vshrl.u32 %v992, 7
        %v994 = vsub.s32 0, %v993
        %v995 = vrot.slane %v990, %v994
        %998 = vrot.lane.b32.xlu0 %v986, 96
        %v999 = vpop.permute.xlu0 %998
        %vm1000 = vcmask 64512
        %v1002 = vsel %vm1000, %v986, 0
        %v1005 = vsel %vm1000, %v999, 0
        %1007 = vmatprep.subr.bf16.mxu0 0
        %1008 = vmatpush1.bf16.xpose.msra.mxu0 %v1005
        %1009 = vmatprep.subr.bf16.mxu0 0
        %1010 = vmatpush1.bf16.xpose.msra.mxu0 0
        %1011 = vmatprep.subr.bf16.mxu0 0
        %1012 = vmatpush1.bf16.xpose.msra.mxu0 0
        %1013 = vmatprep.subr.bf16.mxu0 0
        %1014 = vmatpush1.bf16.xpose.msra.mxu0 0
        %1015 = vmatprep.subr.bf16.mxu0 0
        %1016 = vmatpush1.bf16.xpose.msra.mxu0 0
        %1017 = vmatprep.subr.bf16.mxu0 0
        %1018 = vmatpush1.bf16.xpose.msra.mxu0 0
        %1019 = vmatprep.subr.bf16.mxu0 0
        %1020 = vmatpush1.bf16.xpose.msra.mxu0 0
        %1021 = vmatprep.subr.bf16.mxu0 0
        %1022 = vmatpush1.bf16.xpose.msra.mxu0 0
        %1023 = vmatprep.subr.bf16.mxu0 0
        %1024 = vmatpush1.bf16.xpose.msra.mxu0 0
        %1025 = vmatprep.subr.bf16.mxu0 0
        %1026 = vmatpush1.bf16.xpose.msra.mxu0 0
        %1027 = vmatprep.subr.bf16.mxu0 0
        %1028 = vmatpush1.bf16.xpose.msra.mxu0 0
        %1029 = vmatprep.subr.bf16.mxu0 0
        %1030 = vmatpush1.bf16.xpose.msra.mxu0 0
        %1031 = vmatprep.subr.bf16.mxu0 0
        %1032 = vmatpush1.bf16.xpose.msra.mxu0 0
        %1033 = vmatprep.subr.bf16.mxu0 0
        %1034 = vmatpush1.bf16.xpose.msra.mxu0 0
        %1035 = vmatprep.subr.bf16.mxu0 0
        %1036 = vmatpush1.bf16.xpose.msra.mxu0 0
        %1037 = vmatprep.subr.bf16.mxu0 0
        %1038 = vmatpush1.bf16.xpose.msra.mxu0 0
        %1039 = vmatprep.mubr.bf16.mxu0 0
        %1040 = vmatmul.mubr.bf16.gmra.mrb[0].mxu0 %v1002
        %v1041 = vpop.f32.mrb[0].mxu0
        %v1042 = vadd.f32 %v995, %v1041
        %v1043 = vpop.f32.mrb[0].mxu0
        %v1044 = vpop.f32.mrb[0].mxu0
        %v1045 = vpop.f32.mrb[0].mxu0
        %1046 = vdwg.mxu0
        %1048 = vrot.lane.b32.xlu0 %v987, 96
        %v1049 = vpop.permute.xlu0 %1048
        %v1051 = vsel %vm1000, %v987, 0
        %v1054 = vsel %vm1000, %v1049, 0
        %1056 = vmatprep.subr.bf16.mxu0 0
        %1057 = vmatpush1.bf16.xpose.msra.mxu0 %v1054
        %1058 = vmatprep.subr.bf16.mxu0 0
        %1059 = vmatpush1.bf16.xpose.msra.mxu0 0
        %1060 = vmatprep.subr.bf16.mxu0 0
        %1061 = vmatpush1.bf16.xpose.msra.mxu0 0
        %1062 = vmatprep.subr.bf16.mxu0 0
        %1063 = vmatpush1.bf16.xpose.msra.mxu0 0
        %1064 = vmatprep.subr.bf16.mxu0 0
        %1065 = vmatpush1.bf16.xpose.msra.mxu0 0
        %1066 = vmatprep.subr.bf16.mxu0 0
        %1067 = vmatpush1.bf16.xpose.msra.mxu0 0
        %1068 = vmatprep.subr.bf16.mxu0 0
        %1069 = vmatpush1.bf16.xpose.msra.mxu0 0
        %1070 = vmatprep.subr.bf16.mxu0 0
        %1071 = vmatpush1.bf16.xpose.msra.mxu0 0
        %1072 = vmatprep.subr.bf16.mxu0 0
        %1073 = vmatpush1.bf16.xpose.msra.mxu0 0
        %1074 = vmatprep.subr.bf16.mxu0 0
        %1075 = vmatpush1.bf16.xpose.msra.mxu0 0
        %1076 = vmatprep.subr.bf16.mxu0 0
        %1077 = vmatpush1.bf16.xpose.msra.mxu0 0
        %1078 = vmatprep.subr.bf16.mxu0 0
        %1079 = vmatpush1.bf16.xpose.msra.mxu0 0
        %1080 = vmatprep.subr.bf16.mxu0 0
        %1081 = vmatpush1.bf16.xpose.msra.mxu0 0
        %1082 = vmatprep.subr.bf16.mxu0 0
        %1083 = vmatpush1.bf16.xpose.msra.mxu0 0
        %1084 = vmatprep.subr.bf16.mxu0 0
        %1085 = vmatpush1.bf16.xpose.msra.mxu0 0
        %1086 = vmatprep.subr.bf16.mxu0 0
        %1087 = vmatpush1.bf16.xpose.msra.mxu0 0
        %1088 = vmatprep.mubr.bf16.mxu0 0
        %1089 = vmatmul.mubr.bf16.gmra.mrb[0].mxu0 %v1051
        %v1090 = vpop.f32.mrb[0].mxu0
        %v1091 = vadd.f32 %v995, %v1090
        %v1092 = vpop.f32.mrb[0].mxu0
        %v1093 = vpop.f32.mrb[0].mxu0
        %v1094 = vpop.f32.mrb[0].mxu0
        %1095 = vdwg.mxu0
        %1097 = vrot.lane.b32.xlu0 %v988, 96
        %v1098 = vpop.permute.xlu0 %1097
        %v1100 = vsel %vm1000, %v988, 0
        %v1103 = vsel %vm1000, %v1098, 0
        %1105 = vmatprep.subr.bf16.mxu0 0
        %1106 = vmatpush1.bf16.xpose.msra.mxu0 %v1103
        %1107 = vmatprep.subr.bf16.mxu0 0
        %1108 = vmatpush1.bf16.xpose.msra.mxu0 0
        %1109 = vmatprep.subr.bf16.mxu0 0
        %1110 = vmatpush1.bf16.xpose.msra.mxu0 0
        %1111 = vmatprep.subr.bf16.mxu0 0
        %1112 = vmatpush1.bf16.xpose.msra.mxu0 0
        %1113 = vmatprep.subr.bf16.mxu0 0
        %1114 = vmatpush1.bf16.xpose.msra.mxu0 0
        %1115 = vmatprep.subr.bf16.mxu0 0
        %1116 = vmatpush1.bf16.xpose.msra.mxu0 0
        %1117 = vmatprep.subr.bf16.mxu0 0
        %1118 = vmatpush1.bf16.xpose.msra.mxu0 0
        %1119 = vmatprep.subr.bf16.mxu0 0
        %1120 = vmatpush1.bf16.xpose.msra.mxu0 0
        %1121 = vmatprep.subr.bf16.mxu0 0
        %1122 = vmatpush1.bf16.xpose.msra.mxu0 0
        %1123 = vmatprep.subr.bf16.mxu0 0
        %1124 = vmatpush1.bf16.xpose.msra.mxu0 0
        %1125 = vmatprep.subr.bf16.mxu0 0
        %1126 = vmatpush1.bf16.xpose.msra.mxu0 0
        %1127 = vmatprep.subr.bf16.mxu0 0
        %1128 = vmatpush1.bf16.xpose.msra.mxu0 0
        %1129 = vmatprep.subr.bf16.mxu0 0
        %1130 = vmatpush1.bf16.xpose.msra.mxu0 0
        %1131 = vmatprep.subr.bf16.mxu0 0
        %1132 = vmatpush1.bf16.xpose.msra.mxu0 0
        %1133 = vmatprep.subr.bf16.mxu0 0
        %1134 = vmatpush1.bf16.xpose.msra.mxu0 0
        %1135 = vmatprep.subr.bf16.mxu0 0
        %1136 = vmatpush1.bf16.xpose.msra.mxu0 0
        %1137 = vmatprep.mubr.bf16.mxu0 0
        %1138 = vmatmul.mubr.bf16.gmra.mrb[0].mxu0 %v1100
        %v1139 = vpop.f32.mrb[0].mxu0
        %v1140 = vadd.f32 %v995, %v1139
        %v1141 = vpop.f32.mrb[0].mxu0
        %v1142 = vpop.f32.mrb[0].mxu0
        %v1143 = vpop.f32.mrb[0].mxu0
        %1144 = vdwg.mxu0
        %1146 = vrot.lane.b32.xlu0 %v989, 96
        %v1147 = vpop.permute.xlu0 %1146
        %v1149 = vsel %vm1000, %v989, 0
        %v1152 = vsel %vm1000, %v1147, 0
        %1154 = vmatprep.subr.bf16.mxu0 0
        %1155 = vmatpush1.bf16.xpose.msra.mxu0 %v1152
        %1156 = vmatprep.subr.bf16.mxu0 0
        %1157 = vmatpush1.bf16.xpose.msra.mxu0 0
        %1158 = vmatprep.subr.bf16.mxu0 0
        %1159 = vmatpush1.bf16.xpose.msra.mxu0 0
        %1160 = vmatprep.subr.bf16.mxu0 0
        %1161 = vmatpush1.bf16.xpose.msra.mxu0 0
        %1162 = vmatprep.subr.bf16.mxu0 0
        %1163 = vmatpush1.bf16.xpose.msra.mxu0 0
        %1164 = vmatprep.subr.bf16.mxu0 0
        %1165 = vmatpush1.bf16.xpose.msra.mxu0 0
        %1166 = vmatprep.subr.bf16.mxu0 0
        %1167 = vmatpush1.bf16.xpose.msra.mxu0 0
        %1168 = vmatprep.subr.bf16.mxu0 0
        %1169 = vmatpush1.bf16.xpose.msra.mxu0 0
        %1170 = vmatprep.subr.bf16.mxu0 0
        %1171 = vmatpush1.bf16.xpose.msra.mxu0 0
        %1172 = vmatprep.subr.bf16.mxu0 0
        %1173 = vmatpush1.bf16.xpose.msra.mxu0 0
        %1174 = vmatprep.subr.bf16.mxu0 0
        %1175 = vmatpush1.bf16.xpose.msra.mxu0 0
        %1176 = vmatprep.subr.bf16.mxu0 0
        %1177 = vmatpush1.bf16.xpose.msra.mxu0 0
        %1178 = vmatprep.subr.bf16.mxu0 0
        %1179 = vmatpush1.bf16.xpose.msra.mxu0 0
        %1180 = vmatprep.subr.bf16.mxu0 0
        %1181 = vmatpush1.bf16.xpose.msra.mxu0 0
        %1182 = vmatprep.subr.bf16.mxu0 0
        %1183 = vmatpush1.bf16.xpose.msra.mxu0 0
        %1184 = vmatprep.subr.bf16.mxu0 0
        %1185 = vmatpush1.bf16.xpose.msra.mxu0 0
        %1186 = vmatprep.mubr.bf16.mxu0 0
        %1187 = vmatmul.mubr.bf16.gmra.mrb[0].mxu0 %v1149
        %v1188 = vpop.f32.mrb[0].mxu0
        %v1189 = vadd.f32 %v995, %v1188
        %v1190 = vpop.f32.mrb[0].mxu0
        %v1191 = vpop.f32.mrb[0].mxu0
        %v1192 = vpop.f32.mrb[0].mxu0
        %1193 = vdwg.mxu0
        %v1194 = vsel %vm1000, %v1042, -inf
        %1195 = vmax.xlane.f32.xlu0 %v1194
        %v1196 = vpop.xlane.xlu0 %1195
        %v1197 = vsel %vm1000, %v1091, -inf
        %1198 = vmax.xlane.f32.xlu0 %v1197
        %v1199 = vpop.xlane.xlu0 %1198
        %v1200 = vsel %vm1000, %v1140, -inf
        %1201 = vmax.xlane.f32.xlu0 %v1200
        %v1202 = vpop.xlane.xlu0 %1201
        %v1203 = vsel %vm1000, %v1189, -inf
        %1204 = vmax.xlane.f32.xlu0 %v1203
        %v1205 = vpop.xlane.xlu0 %1204
        %v1206 = vsub.f32 %v1042, %v1196
        %v1207 = vsub.f32 %v1091, %v1199
        %v1208 = vsub.f32 %v1140, %v1202
        %v1209 = vsub.f32 %v1189, %v1205
        %v1210 = vmul.f32 %v1206, 1.442695
        %v1211 = vpow.pop %v1210
        %v1212 = vmul.f32 %v1207, 1.442695
        %v1213 = vpow.pop %v1212
        %v1214 = vmul.f32 %v1208, 1.442695
        %v1215 = vpow.pop %v1214
        %v1216 = vmul.f32 %v1209, 1.442695
        %v1217 = vpow.pop %v1216
        %v1218 = vsel %vm1000, %v1211, 0.0
        %1219 = vadd.xlane.f32.xlu0 %v1218
        %v1220 = vpop.xlane.xlu0 %1219
        %v1221 = vsel %vm1000, %v1213, 0.0
        %1222 = vadd.xlane.f32.xlu0 %v1221
        %v1223 = vpop.xlane.xlu0 %1222
        %v1224 = vsel %vm1000, %v1215, 0.0
        %1225 = vadd.xlane.f32.xlu0 %v1224
        %v1226 = vpop.xlane.xlu0 %1225
        %v1227 = vsel %vm1000, %v1217, 0.0
        %1228 = vadd.xlane.f32.xlu0 %v1227
        %v1229 = vpop.xlane.xlu0 %1228
        %v1230 = vrcp.pop %v1220
        %v1231 = vrcp.pop %v1223
        %v1232 = vrcp.pop %v1226
        %v1233 = vrcp.pop %v1229
        %v1234 = vmul.f32 %v1211, %v1230
        %v1235 = vmul.f32 %v1213, %v1231
        %v1236 = vmul.f32 %v1215, %v1232
        %v1237 = vmul.f32 %v1217, %v1233
        %v1238 = vpack.c.bf16 %v1234, %v1234
        %v1239 = vpack.c.bf16 %v1235, %v1235
        %v1240 = vpack.c.bf16 %v1236, %v1236
        %v1241 = vpack.c.bf16 %v1237, %v1237
        %1242 = vrot.lane.b32.xlu0 %v986, 64
        %v1243 = vpop.permute.xlu0 %1242
        %v1245 = vsel %vm1000, %v1238, 0
        %vm1247 = vcmask 1043456
        %v1249 = vsel %vm1247, %v1243, 0
        %1251 = vmatprep.subr.bf16.mxu0 0
        %1252 = vmatpush1.bf16.msra.mxu0 %v1249
        %1253 = vmatprep.subr.bf16.mxu0 0
        %1254 = vmatpush1.bf16.msra.mxu0 0
        %1255 = vmatprep.subr.bf16.mxu0 0
        %1256 = vmatpush1.bf16.msra.mxu0 0
        %1257 = vmatprep.subr.bf16.mxu0 0
        %1258 = vmatpush1.bf16.msra.mxu0 0
        %1259 = vmatprep.subr.bf16.mxu0 0
        %1260 = vmatpush1.bf16.msra.mxu0 0
        %1261 = vmatprep.subr.bf16.mxu0 0
        %1262 = vmatpush1.bf16.msra.mxu0 0
        %1263 = vmatprep.subr.bf16.mxu0 0
        %1264 = vmatpush1.bf16.msra.mxu0 0
        %1265 = vmatprep.subr.bf16.mxu0 0
        %1266 = vmatpush1.bf16.msra.mxu0 0
        %1267 = vmatprep.subr.bf16.mxu0 0
        %1268 = vmatpush1.bf16.msra.mxu0 0
        %1269 = vmatprep.subr.bf16.mxu0 0
        %1270 = vmatpush1.bf16.msra.mxu0 0
        %1271 = vmatprep.subr.bf16.mxu0 0
        %1272 = vmatpush1.bf16.msra.mxu0 0
        %1273 = vmatprep.subr.bf16.mxu0 0
        %1274 = vmatpush1.bf16.msra.mxu0 0
        %1275 = vmatprep.subr.bf16.mxu0 0
        %1276 = vmatpush1.bf16.msra.mxu0 0
        %1277 = vmatprep.subr.bf16.mxu0 0
        %1278 = vmatpush1.bf16.msra.mxu0 0
        %1279 = vmatprep.subr.bf16.mxu0 0
        %1280 = vmatpush1.bf16.msra.mxu0 0
        %1281 = vmatprep.subr.bf16.mxu0 0
        %1282 = vmatpush1.bf16.msra.mxu0 0
        %1283 = vmatprep.mubr.bf16.mxu0 0
        %1284 = vmatmul.mubr.bf16.gmra.mrb[0].mxu0 %v1245
        %v1285 = vpop.f32.mrb[0].mxu0
        %v1286 = vadd.f32 0.0, %v1285
        %v1287 = vpop.f32.mrb[0].mxu0
        %v1288 = vpop.f32.mrb[0].mxu0
        %v1289 = vpop.f32.mrb[0].mxu0
        %1290 = vdwg.mxu0
        %1291 = vrot.lane.b32.xlu0 %v987, 64
        %v1292 = vpop.permute.xlu0 %1291
        %v1294 = vsel %vm1000, %v1239, 0
        %v1297 = vsel %vm1247, %v1292, 0
        %1299 = vmatprep.subr.bf16.mxu0 0
        %1300 = vmatpush1.bf16.msra.mxu0 %v1297
        %1301 = vmatprep.subr.bf16.mxu0 0
        %1302 = vmatpush1.bf16.msra.mxu0 0
        %1303 = vmatprep.subr.bf16.mxu0 0
        %1304 = vmatpush1.bf16.msra.mxu0 0
        %1305 = vmatprep.subr.bf16.mxu0 0
        %1306 = vmatpush1.bf16.msra.mxu0 0
        %1307 = vmatprep.subr.bf16.mxu0 0
        %1308 = vmatpush1.bf16.msra.mxu0 0
        %1309 = vmatprep.subr.bf16.mxu0 0
        %1310 = vmatpush1.bf16.msra.mxu0 0
        %1311 = vmatprep.subr.bf16.mxu0 0
        %1312 = vmatpush1.bf16.msra.mxu0 0
        %1313 = vmatprep.subr.bf16.mxu0 0
        %1314 = vmatpush1.bf16.msra.mxu0 0
        %1315 = vmatprep.subr.bf16.mxu0 0
        %1316 = vmatpush1.bf16.msra.mxu0 0
        %1317 = vmatprep.subr.bf16.mxu0 0
        %1318 = vmatpush1.bf16.msra.mxu0 0
        %1319 = vmatprep.subr.bf16.mxu0 0
        %1320 = vmatpush1.bf16.msra.mxu0 0
        %1321 = vmatprep.subr.bf16.mxu0 0
        %1322 = vmatpush1.bf16.msra.mxu0 0
        %1323 = vmatprep.subr.bf16.mxu0 0
        %1324 = vmatpush1.bf16.msra.mxu0 0
        %1325 = vmatprep.subr.bf16.mxu0 0
        %1326 = vmatpush1.bf16.msra.mxu0 0
        %1327 = vmatprep.subr.bf16.mxu0 0
        %1328 = vmatpush1.bf16.msra.mxu0 0
        %1329 = vmatprep.subr.bf16.mxu0 0
        %1330 = vmatpush1.bf16.msra.mxu0 0
        %1331 = vmatprep.mubr.bf16.mxu0 0
        %1332 = vmatmul.mubr.bf16.gmra.mrb[0].mxu0 %v1294
        %v1333 = vpop.f32.mrb[0].mxu0
        %v1334 = vadd.f32 0.0, %v1333
        %v1335 = vpop.f32.mrb[0].mxu0
        %v1336 = vpop.f32.mrb[0].mxu0
        %v1337 = vpop.f32.mrb[0].mxu0
        %1338 = vdwg.mxu0
        %1339 = vrot.lane.b32.xlu0 %v988, 64
        %v1340 = vpop.permute.xlu0 %1339
        %v1342 = vsel %vm1000, %v1240, 0
        %v1345 = vsel %vm1247, %v1340, 0
        %1347 = vmatprep.subr.bf16.mxu0 0
        %1348 = vmatpush1.bf16.msra.mxu0 %v1345
        %1349 = vmatprep.subr.bf16.mxu0 0
        %1350 = vmatpush1.bf16.msra.mxu0 0
        %1351 = vmatprep.subr.bf16.mxu0 0
        %1352 = vmatpush1.bf16.msra.mxu0 0
        %1353 = vmatprep.subr.bf16.mxu0 0
        %1354 = vmatpush1.bf16.msra.mxu0 0
        %1355 = vmatprep.subr.bf16.mxu0 0
        %1356 = vmatpush1.bf16.msra.mxu0 0
        %1357 = vmatprep.subr.bf16.mxu0 0
        %1358 = vmatpush1.bf16.msra.mxu0 0
        %1359 = vmatprep.subr.bf16.mxu0 0
        %1360 = vmatpush1.bf16.msra.mxu0 0
        %1361 = vmatprep.subr.bf16.mxu0 0
        %1362 = vmatpush1.bf16.msra.mxu0 0
        %1363 = vmatprep.subr.bf16.mxu0 0
        %1364 = vmatpush1.bf16.msra.mxu0 0
        %1365 = vmatprep.subr.bf16.mxu0 0
        %1366 = vmatpush1.bf16.msra.mxu0 0
        %1367 = vmatprep.subr.bf16.mxu0 0
        %1368 = vmatpush1.bf16.msra.mxu0 0
        %1369 = vmatprep.subr.bf16.mxu0 0
        %1370 = vmatpush1.bf16.msra.mxu0 0
        %1371 = vmatprep.subr.bf16.mxu0 0
        %1372 = vmatpush1.bf16.msra.mxu0 0
        %1373 = vmatprep.subr.bf16.mxu0 0
        %1374 = vmatpush1.bf16.msra.mxu0 0
        %1375 = vmatprep.subr.bf16.mxu0 0
        %1376 = vmatpush1.bf16.msra.mxu0 0
        %1377 = vmatprep.subr.bf16.mxu0 0
        %1378 = vmatpush1.bf16.msra.mxu0 0
        %1379 = vmatprep.mubr.bf16.mxu0 0
        %1380 = vmatmul.mubr.bf16.gmra.mrb[0].mxu0 %v1342
        %v1381 = vpop.f32.mrb[0].mxu0
        %v1382 = vadd.f32 0.0, %v1381
        %v1383 = vpop.f32.mrb[0].mxu0
        %v1384 = vpop.f32.mrb[0].mxu0
        %v1385 = vpop.f32.mrb[0].mxu0
        %1386 = vdwg.mxu0
        %1387 = vrot.lane.b32.xlu0 %v989, 64
        %v1388 = vpop.permute.xlu0 %1387
        %v1390 = vsel %vm1000, %v1241, 0
        %v1393 = vsel %vm1247, %v1388, 0
        %1395 = vmatprep.subr.bf16.mxu0 0
        %1396 = vmatpush1.bf16.msra.mxu0 %v1393
        %1397 = vmatprep.subr.bf16.mxu0 0
        %1398 = vmatpush1.bf16.msra.mxu0 0
        %1399 = vmatprep.subr.bf16.mxu0 0
        %1400 = vmatpush1.bf16.msra.mxu0 0
        %1401 = vmatprep.subr.bf16.mxu0 0
        %1402 = vmatpush1.bf16.msra.mxu0 0
        %1403 = vmatprep.subr.bf16.mxu0 0
        %1404 = vmatpush1.bf16.msra.mxu0 0
        %1405 = vmatprep.subr.bf16.mxu0 0
        %1406 = vmatpush1.bf16.msra.mxu0 0
        %1407 = vmatprep.subr.bf16.mxu0 0
        %1408 = vmatpush1.bf16.msra.mxu0 0
        %1409 = vmatprep.subr.bf16.mxu0 0
        %1410 = vmatpush1.bf16.msra.mxu0 0
        %1411 = vmatprep.subr.bf16.mxu0 0
        %1412 = vmatpush1.bf16.msra.mxu0 0
        %1413 = vmatprep.subr.bf16.mxu0 0
        %1414 = vmatpush1.bf16.msra.mxu0 0
        %1415 = vmatprep.subr.bf16.mxu0 0
        %1416 = vmatpush1.bf16.msra.mxu0 0
        %1417 = vmatprep.subr.bf16.mxu0 0
        %1418 = vmatpush1.bf16.msra.mxu0 0
        %1419 = vmatprep.subr.bf16.mxu0 0
        %1420 = vmatpush1.bf16.msra.mxu0 0
        %1421 = vmatprep.subr.bf16.mxu0 0
        %1422 = vmatpush1.bf16.msra.mxu0 0
        %1423 = vmatprep.subr.bf16.mxu0 0
        %1424 = vmatpush1.bf16.msra.mxu0 0
        %1425 = vmatprep.subr.bf16.mxu0 0
        %1426 = vmatpush1.bf16.msra.mxu0 0
        %1427 = vmatprep.mubr.bf16.mxu0 0
        %1428 = vmatmul.mubr.bf16.gmra.mrb[0].mxu0 %v1390
        %v1429 = vpop.f32.mrb[0].mxu0
        %v1430 = vadd.f32 0.0, %v1429
        %v1431 = vpop.f32.mrb[0].mxu0
        %v1432 = vpop.f32.mrb[0].mxu0
        %v1433 = vpop.f32.mrb[0].mxu0
        %1434 = vdwg.mxu0
        %1436 = vrot.lane.b32.xlu0 %v1334, 8
        %v1437 = vpop.permute.xlu0 %1436
        %1440 = vrot.lane.b32.xlu0 %v1382, 16
        %v1441 = vpop.permute.xlu0 %1440
        %1444 = vrot.lane.b32.xlu0 %v1430, 24
        %v1445 = vpop.permute.xlu0 %1444
        %v1447 = vsel %vm1000, %v1286, %v1437
        %vm1448 = vcmask 130048
        %v1449 = vsel %vm1448, %v1447, %v1441
        %vm1450 = vcmask 195584
        %v1451 = vsel %vm1450, %v1449, %v1445
        %v1452 = vpack.c.bf16 %v1451, %v1451
        %v1453 = vld [vmem:[%s833] sm:$0xf]
        %v1454 = vld [vmem:[%s833 + $0x4] sm:$0xf]
        %v1455 = vld [vmem:[%s833 + $0x8] sm:$0xf]
        %v1456 = vld [vmem:[%s833 + $0xc] sm:$0xf]
        %v1457 = vld [vmem:[%s836] sm:$0x1]
        %v1459 = vlaneseq
        %v1460 = vshrl.u32 %v1459, 7
        %v1461 = vsub.s32 0, %v1460
        %v1462 = vrot.slane %v1457, %v1461
        %v1468 = vunpack.c.l.b16 %v1453
        %v1469 = vunpack.c.l.b16 %v1454
        %v1470 = vunpack.c.l.b16 %v1455
        %v1471 = vunpack.c.l.b16 %v1456
        %v1472 = vpack.c.b16 %v1469, %v1468
        %v1473 = vpack.c.b16 %v1471, %v1470
        %v1477 = vsel %vm932, %v1452, 0
        %1479 = vmatprep.subr.bf16.mxu0 0
        %1480 = vmatpush1.bf16.msra.mxu0 %v1472
        %1481 = vmatprep.subr.bf16.mxu0 0
        %1482 = vmatpush1.bf16.msra.mxu0 %v1473
        %1483 = vmatprep.subr.bf16.mxu0 0
        %1484 = vmatpush1.bf16.msra.mxu0 0
        %1485 = vmatprep.subr.bf16.mxu0 0
        %1486 = vmatpush1.bf16.msra.mxu0 0
        %1487 = vmatprep.subr.bf16.mxu0 0
        %1488 = vmatpush1.bf16.msra.mxu0 0
        %1489 = vmatprep.subr.bf16.mxu0 0
        %1490 = vmatpush1.bf16.msra.mxu0 0
        %1491 = vmatprep.subr.bf16.mxu0 0
        %1492 = vmatpush1.bf16.msra.mxu0 0
        %1493 = vmatprep.subr.bf16.mxu0 0
        %1494 = vmatpush1.bf16.msra.mxu0 0
        %1495 = vmatprep.subr.bf16.mxu0 0
        %1496 = vmatpush1.bf16.msra.mxu0 0
        %1497 = vmatprep.subr.bf16.mxu0 0
        %1498 = vmatpush1.bf16.msra.mxu0 0
        %1499 = vmatprep.subr.bf16.mxu0 0
        %1500 = vmatpush1.bf16.msra.mxu0 0
        %1501 = vmatprep.subr.bf16.mxu0 0
        %1502 = vmatpush1.bf16.msra.mxu0 0
        %1503 = vmatprep.subr.bf16.mxu0 0
        %1504 = vmatpush1.bf16.msra.mxu0 0
        %1505 = vmatprep.subr.bf16.mxu0 0
        %1506 = vmatpush1.bf16.msra.mxu0 0
        %1507 = vmatprep.subr.bf16.mxu0 0
        %1508 = vmatpush1.bf16.msra.mxu0 0
        %1509 = vmatprep.subr.bf16.mxu0 0
        %1510 = vmatpush1.bf16.msra.mxu0 0
        %1511 = vmatprep.mubr.bf16.mxu0 0
        %1512 = vmatmul.mubr.bf16.gmra.mrb[0].mxu0 %v1477
        %v1513 = vpop.f32.mrb[0].mxu0
        %v1514 = vadd.f32 %v1462, %v1513
        %v1515 = vpop.f32.mrb[0].mxu0
        %v1516 = vpop.f32.mrb[0].mxu0
        %v1517 = vpop.f32.mrb[0].mxu0
        %1518 = vdwg.mxu0
        %v1519 = vadd.f32 %v907, %v1514
        %v1520 = vld [vmem:[%s839] sm:$0x1]
        %v1521 = vld [vmem:[%s842] sm:$0x1]
        %v1522 = vsel %vm932, %v1519, 0.0
        %1523 = vadd.xlane.f32.xlu0 %v1522
        %v1524 = vpop.xlane.xlu0 %1523
        %v1525 = vrcp.pop 32.0
        %v1526 = vmul.f32 %v1524, %v1525
        %v1527 = vsub.f32 %v1519, %v1526
        %v1528 = vmul.f32 %v1527, %v1527
        %v1529 = vsel %vm932, %v1528, 0.0
        %1530 = vadd.xlane.f32.xlu0 %v1529
        %v1531 = vpop.xlane.xlu0 %1530
        %v1532 = vmul.f32 %v1531, %v1525
        %v1533 = vadd.f32 %v1532, 1e-05
        %v1534 = vrsqrt.pop %v1533
        %v1535 = vmul.f32 %v1527, %v1534
        %v1537 = vlaneseq
        %v1538 = vshrl.u32 %v1537, 7
        %v1539 = vsub.s32 0, %v1538
        %v1540 = vrot.slane %v1520, %v1539
        %v1542 = vmul.f32 %v1535, %v1540
        %v1544 = vlaneseq
        %v1545 = vshrl.u32 %v1544, 7
        %v1546 = vsub.s32 0, %v1545
        %v1547 = vrot.slane %v1521, %v1546
        %v1549 = vadd.f32 %v1542, %v1547
        %v1550 = vpack.c.bf16 %v1549, %v1549
        %v1551 = vld [vmem:[%s847] sm:$0xf]
        %v1552 = vld [vmem:[%s847 + $0x4] sm:$0xf]
        %v1553 = vld [vmem:[%s847 + $0x8] sm:$0xf]
        %v1554 = vld [vmem:[%s847 + $0xc] sm:$0xf]
        %v1555 = vld [vmem:[%s850] sm:$0x1]
        %v1557 = vlaneseq
        %v1558 = vshrl.u32 %v1557, 7
        %v1559 = vsub.s32 0, %v1558
        %v1560 = vrot.slane %v1555, %v1559
        %v1566 = vunpack.c.l.b16 %v1551
        %v1567 = vunpack.c.l.b16 %v1552
        %v1568 = vunpack.c.l.b16 %v1553
        %v1569 = vunpack.c.l.b16 %v1554
        %v1570 = vpack.c.b16 %v1567, %v1566
        %v1571 = vpack.c.b16 %v1569, %v1568
        %v1575 = vsel %vm932, %v1550, 0
        %1577 = vmatprep.subr.bf16.mxu0 0
        %1578 = vmatpush1.bf16.msra.mxu0 %v1570
        %1579 = vmatprep.subr.bf16.mxu0 0
        %1580 = vmatpush1.bf16.msra.mxu0 %v1571
        %1581 = vmatprep.subr.bf16.mxu0 0
        %1582 = vmatpush1.bf16.msra.mxu0 0
        %1583 = vmatprep.subr.bf16.mxu0 0
        %1584 = vmatpush1.bf16.msra.mxu0 0
        %1585 = vmatprep.subr.bf16.mxu0 0
        %1586 = vmatpush1.bf16.msra.mxu0 0
        %1587 = vmatprep.subr.bf16.mxu0 0
        %1588 = vmatpush1.bf16.msra.mxu0 0
        %1589 = vmatprep.subr.bf16.mxu0 0
        %1590 = vmatpush1.bf16.msra.mxu0 0
        %1591 = vmatprep.subr.bf16.mxu0 0
        %1592 = vmatpush1.bf16.msra.mxu0 0
        %1593 = vmatprep.subr.bf16.mxu0 0
        %1594 = vmatpush1.bf16.msra.mxu0 0
        %1595 = vmatprep.subr.bf16.mxu0 0
        %1596 = vmatpush1.bf16.msra.mxu0 0
        %1597 = vmatprep.subr.bf16.mxu0 0
        %1598 = vmatpush1.bf16.msra.mxu0 0
        %1599 = vmatprep.subr.bf16.mxu0 0
        %1600 = vmatpush1.bf16.msra.mxu0 0
        %1601 = vmatprep.subr.bf16.mxu0 0
        %1602 = vmatpush1.bf16.msra.mxu0 0
        %1603 = vmatprep.subr.bf16.mxu0 0
        %1604 = vmatpush1.bf16.msra.mxu0 0
        %1605 = vmatprep.subr.bf16.mxu0 0
        %1606 = vmatpush1.bf16.msra.mxu0 0
        %1607 = vmatprep.subr.bf16.mxu0 0
        %1608 = vmatpush1.bf16.msra.mxu0 0
        %1609 = vmatprep.mubr.bf16.mxu0 0
        %1610 = vmatmul.mubr.bf16.gmra.mrb[0].mxu0 %v1575
        %v1611 = vpop.f32.mrb[0].mxu0
        %v1612 = vadd.f32 %v1560, %v1611
        %v1613 = vpop.f32.mrb[0].mxu0
        %v1614 = vpop.f32.mrb[0].mxu0
        %v1615 = vpop.f32.mrb[0].mxu0
        %1616 = vdwg.mxu0
        %v1617 = vmul.f32 %v1612, 0.5
        %v1618 = vmul.f32 %v1612, 0.044715
        %v1619 = vmul.f32 %v1618, %v1612
        %v1620 = vmul.f32 %v1619, %v1612
        %v1621 = vadd.f32 %v1612, %v1620
        %v1622 = vmul.f32 %v1621, 0.7978846
        %v1623 = vtanh.pop %v1622
        %v1624 = vadd.f32 %v1623, 1.0
        %v1625 = vmul.f32 %v1617, %v1624
        %v1626 = vpack.c.bf16 %v1625, %v1625
        %v1627 = vld [vmem:[%s855] sm:$0xf]
        %v1628 = vld [vmem:[%s855 + $0x4] sm:$0xf]
        %v1629 = vld [vmem:[%s855 + $0x8] sm:$0xf]
        %v1630 = vld [vmem:[%s855 + $0xc] sm:$0xf]
        %v1631 = vld [vmem:[%s855 + $0x10] sm:$0xf]
        %v1632 = vld [vmem:[%s855 + $0x14] sm:$0xf]
        %v1633 = vld [vmem:[%s855 + $0x18] sm:$0xf]
        %v1634 = vld [vmem:[%s855 + $0x1c] sm:$0xf]
        %v1635 = vld [vmem:[%s858] sm:$0x1]
        %v1637 = vlaneseq
        %v1638 = vshrl.u32 %v1637, 7
        %v1639 = vsub.s32 0, %v1638
        %v1640 = vrot.slane %v1635, %v1639
        %v1650 = vunpack.c.l.b16 %v1627
        %v1651 = vunpack.c.l.b16 %v1628
        %v1652 = vunpack.c.l.b16 %v1629
        %v1653 = vunpack.c.l.b16 %v1630
        %v1654 = vunpack.c.l.b16 %v1631
        %v1655 = vunpack.c.l.b16 %v1632
        %v1656 = vunpack.c.l.b16 %v1633
        %v1657 = vunpack.c.l.b16 %v1634
        %v1658 = vpack.c.b16 %v1651, %v1650
        %v1659 = vpack.c.b16 %v1653, %v1652
        %v1660 = vpack.c.b16 %v1655, %v1654
        %v1661 = vpack.c.b16 %v1657, %v1656
        %vm1666 = vcmask 523264
        %v1668 = vsel %vm1666, %v1626, 0
        %1670 = vmatprep.subr.bf16.mxu0 0
        %1671 = vmatpush1.bf16.msra.mxu0 %v1658
        %1672 = vmatprep.subr.bf16.mxu0 0
        %1673 = vmatpush1.bf16.msra.mxu0 %v1659
        %1674 = vmatprep.subr.bf16.mxu0 0
        %1675 = vmatpush1.bf16.msra.mxu0 %v1660
        %1676 = vmatprep.subr.bf16.mxu0 0
        %1677 = vmatpush1.bf16.msra.mxu0 %v1661
        %1678 = vmatprep.subr.bf16.mxu0 0
        %1679 = vmatpush1.bf16.msra.mxu0 0
        %1680 = vmatprep.subr.bf16.mxu0 0
        %1681 = vmatpush1.bf16.msra.mxu0 0
        %1682 = vmatprep.subr.bf16.mxu0 0
        %1683 = vmatpush1.bf16.msra.mxu0 0
        %1684 = vmatprep.subr.bf16.mxu0 0
        %1685 = vmatpush1.bf16.msra.mxu0 0
        %1686 = vmatprep.subr.bf16.mxu0 0
        %1687 = vmatpush1.bf16.msra.mxu0 0
        %1688 = vmatprep.subr.bf16.mxu0 0
        %1689 = vmatpush1.bf16.msra.mxu0 0
        %1690 = vmatprep.subr.bf16.mxu0 0
        %1691 = vmatpush1.bf16.msra.mxu0 0
        %1692 = vmatprep.subr.bf16.mxu0 0
        %1693 = vmatpush1.bf16.msra.mxu0 0
        %1694 = vmatprep.subr.bf16.mxu0 0
        %1695 = vmatpush1.bf16.msra.mxu0 0
        %1696 = vmatprep.subr.bf16.mxu0 0
        %1697 = vmatpush1.bf16.msra.mxu0 0
        %1698 = vmatprep.subr.bf16.mxu0 0
        %1699 = vmatpush1.bf16.msra.mxu0 0
        %1700 = vmatprep.subr.bf16.mxu0 0
        %1701 = vmatpush1.bf16.msra.mxu0 0
        %1702 = vmatprep.mubr.bf16.mxu0 0
        %1703 = vmatmul.mubr.bf16.gmra.mrb[0].mxu0 %v1668
        %v1704 = vpop.f32.mrb[0].mxu0
        %v1705 = vadd.f32 %v1640, %v1704
        %v1706 = vpop.f32.mrb[0].mxu0
        %v1707 = vpop.f32.mrb[0].mxu0
        %v1708 = vpop.f32.mrb[0].mxu0
        %1709 = vdwg.mxu0
        %v1710 = vadd.f32 %v1549, %v1705
        %v1711 = vld [vmem:[%s861] sm:$0x1]
        %v1712 = vld [vmem:[%s864] sm:$0x1]
        %v1713 = vsel %vm932, %v1710, 0.0
        %1714 = vadd.xlane.f32.xlu0 %v1713
        %v1715 = vpop.xlane.xlu0 %1714
        %v1716 = vmul.f32 %v1715, %v1525
        %v1717 = vsub.f32 %v1710, %v1716
        %v1718 = vmul.f32 %v1717, %v1717
        %v1719 = vsel %vm932, %v1718, 0.0
        %1720 = vadd.xlane.f32.xlu0 %v1719
        %v1721 = vpop.xlane.xlu0 %1720
        %v1722 = vmul.f32 %v1721, %v1525
        %v1723 = vadd.f32 %v1722, 1e-05
        %v1724 = vrsqrt.pop %v1723
        %v1725 = vmul.f32 %v1717, %v1724
        %v1727 = vlaneseq
        %v1728 = vshrl.u32 %v1727, 7
        %v1729 = vsub.s32 0, %v1728
        %v1730 = vrot.slane %v1711, %v1729
        %v1732 = vmul.f32 %v1725, %v1730
        %v1734 = vlaneseq
        %v1735 = vshrl.u32 %v1734, 7
        %v1736 = vsub.s32 0, %v1735
        %v1737 = vrot.slane %v1712, %v1736
        %v1739 = vadd.f32 %v1732, %v1737
        %1740 = vst.msk [vmem:[#allocation2] sm:$0xff] %vm932, %v1739
        %p1741 = scmp.eq.s32.totalorder %s38, 1
        // Predicated region
        $region113: #{tpu_custom_call.1} parent=99 // pred_check
          %p1742 = pneg %p1741
        $region114: #{tpu_custom_call.1} parent=99 // pred_check_branch
          %1744 = sbr.rel (%p1742) target = $region116
        $region115: #{tpu_custom_call.1} parent=99 // pred_region
          %v1745 = vld [vmem:[%s16] sm:$0xff]
          %v1746 = vld [vmem:[%s16 + $0x8] sm:$0xff]
          %v1747 = vld [vmem:[%s16 + $0x10] sm:$0xff]
          %v1748 = vld [vmem:[%s16 + $0x18] sm:$0xff]
          %v1749 = vld [vmem:[%s17] sm:$0x1]
          %v1751 = vlaneseq
          %v1752 = vshrl.u32 %v1751, 7
          %v1753 = vsub.s32 0, %v1752
          %v1754 = vrot.slane %v1749, %v1753
          %v1757 = vsel %vm932, %v1739, 0
          %1759 = vmatprep.subr.mxu0 0.0
          %1760 = vmatpush1.msra.mxu0 %v1745
          %1761 = vmatprep.subr.mxu0 0.0
          %1762 = vmatpush1.msra.mxu0 %v1746
          %1763 = vmatprep.subr.mxu0 0.0
          %1764 = vmatpush1.msra.mxu0 %v1747
          %1765 = vmatprep.subr.mxu0 0.0
          %1766 = vmatpush1.msra.mxu0 %v1748
          %1767 = vmatprep.subr.mxu0 0.0
          %1768 = vmatpush1.msra.mxu0 0.0
          %1769 = vmatprep.subr.mxu0 0.0
          %1770 = vmatpush1.msra.mxu0 0.0
          %1771 = vmatprep.subr.mxu0 0.0
          %1772 = vmatpush1.msra.mxu0 0.0
          %1773 = vmatprep.subr.mxu0 0.0
          %1774 = vmatpush1.msra.mxu0 0.0
          %1775 = vmatprep.subr.mxu0 0.0
          %1776 = vmatpush1.msra.mxu0 0.0
          %1777 = vmatprep.subr.mxu0 0.0
          %1778 = vmatpush1.msra.mxu0 0.0
          %1779 = vmatprep.subr.mxu0 0.0
          %1780 = vmatpush1.msra.mxu0 0.0
          %1781 = vmatprep.subr.mxu0 0.0
          %1782 = vmatpush1.msra.mxu0 0.0
          %1783 = vmatprep.subr.mxu0 0.0
          %1784 = vmatpush1.msra.mxu0 0.0
          %1785 = vmatprep.subr.mxu0 0.0
          %1786 = vmatpush1.msra.mxu0 0.0
          %1787 = vmatprep.subr.mxu0 0.0
          %1788 = vmatpush1.msra.mxu0 0.0
          %1789 = vmatprep.subr.mxu0 0.0
          %1790 = vmatpush1.msra.mxu0 0.0
          %1791 = vmatprep.subr.mxu0 0.0
          %1792 = vmatpush1.msra.mxu0 0.0
          %1793 = vmatprep.subr.mxu0 0.0
          %1794 = vmatpush1.msra.mxu0 0.0
          %1795 = vmatprep.subr.mxu0 0.0
          %1796 = vmatpush1.msra.mxu0 0.0
          %1797 = vmatprep.subr.mxu0 0.0
          %1798 = vmatpush1.msra.mxu0 0.0
          %1799 = vmatprep.subr.mxu0 0.0
          %1800 = vmatpush1.msra.mxu0 0.0
          %1801 = vmatprep.subr.mxu0 0.0
          %1802 = vmatpush1.msra.mxu0 0.0
          %1803 = vmatprep.subr.mxu0 0.0
          %1804 = vmatpush1.msra.mxu0 0.0
          %1805 = vmatprep.subr.mxu0 0.0
          %1806 = vmatpush1.msra.mxu0 0.0
          %1807 = vmatprep.subr.mxu0 0.0
          %1808 = vmatpush1.msra.mxu0 0.0
          %1809 = vmatprep.subr.mxu0 0.0
          %1810 = vmatpush1.msra.mxu0 0.0
          %1811 = vmatprep.subr.mxu0 0.0
          %1812 = vmatpush1.msra.mxu0 0.0
          %1813 = vmatprep.subr.mxu0 0.0
          %1814 = vmatpush1.msra.mxu0 0.0
          %1815 = vmatprep.subr.mxu0 0.0
          %1816 = vmatpush1.msra.mxu0 0.0
          %1817 = vmatprep.subr.mxu0 0.0
          %1818 = vmatpush1.msra.mxu0 0.0
          %1819 = vmatprep.subr.mxu0 0.0
          %1820 = vmatpush1.msra.mxu0 0.0
          %1821 = vmatprep.subr.mxu0 0.0
          %1822 = vmatpush1.msra.mxu0 0.0
          %1823 = vmatprep.mubr.f32.mxu0 0.0
          %1824 = vmatmul.mubr.f32.gmra.mrb[0].mxu0 %v1757
          %v1825 = vpop.f32.mrb[0].mxu0
          %v1826 = vadd.f32 %v1754, %v1825
          %v1827 = vpop.f32.mrb[0].mxu0
          %1828 = vdwg.mxu0
          %v1829 = vtanh.pop %v1826
          %v1830 = vld [vmem:[%s18] sm:$0xff]
          %v1831 = vld [vmem:[%s18 + $0x8] sm:$0xff]
          %v1832 = vld [vmem:[%s19] sm:$0x1]
          %v1834 = vlaneseq
          %v1835 = vshrl.u32 %v1834, 7
          %v1836 = vsub.s32 0, %v1835
          %v1837 = vrot.slane %v1832, %v1836
          %v1840 = vsel %vm1448, %v1829, 0
          %1842 = vmatprep.subr.mxu0 0.0
          %1843 = vmatpush1.msra.mxu0 %v1830
          %1844 = vmatprep.subr.mxu0 0.0
          %1845 = vmatpush1.msra.mxu0 %v1831
          %1846 = vmatprep.subr.mxu0 0.0
          %1847 = vmatpush1.msra.mxu0 0.0
          %1848 = vmatprep.subr.mxu0 0.0
          %1849 = vmatpush1.msra.mxu0 0.0
          %1850 = vmatprep.subr.mxu0 0.0
          %1851 = vmatpush1.msra.mxu0 0.0
          %1852 = vmatprep.subr.mxu0 0.0
          %1853 = vmatpush1.msra.mxu0 0.0
          %1854 = vmatprep.subr.mxu0 0.0
          %1855 = vmatpush1.msra.mxu0 0.0
          %1856 = vmatprep.subr.mxu0 0.0
          %1857 = vmatpush1.msra.mxu0 0.0
          %1858 = vmatprep.subr.mxu0 0.0
          %1859 = vmatpush1.msra.mxu0 0.0
          %1860 = vmatprep.subr.mxu0 0.0
          %1861 = vmatpush1.msra.mxu0 0.0
          %1862 = vmatprep.subr.mxu0 0.0
          %1863 = vmatpush1.msra.mxu0 0.0
          %1864 = vmatprep.subr.mxu0 0.0
          %1865 = vmatpush1.msra.mxu0 0.0
          %1866 = vmatprep.subr.mxu0 0.0
          %1867 = vmatpush1.msra.mxu0 0.0
          %1868 = vmatprep.subr.mxu0 0.0
          %1869 = vmatpush1.msra.mxu0 0.0
          %1870 = vmatprep.subr.mxu0 0.0
          %1871 = vmatpush1.msra.mxu0 0.0
          %1872 = vmatprep.subr.mxu0 0.0
          %1873 = vmatpush1.msra.mxu0 0.0
          %1874 = vmatprep.subr.mxu0 0.0
          %1875 = vmatpush1.msra.mxu0 0.0
          %1876 = vmatprep.subr.mxu0 0.0
          %1877 = vmatpush1.msra.mxu0 0.0
          %1878 = vmatprep.subr.mxu0 0.0
          %1879 = vmatpush1.msra.mxu0 0.0
          %1880 = vmatprep.subr.mxu0 0.0
          %1881 = vmatpush1.msra.mxu0 0.0
          %1882 = vmatprep.subr.mxu0 0.0
          %1883 = vmatpush1.msra.mxu0 0.0
          %1884 = vmatprep.subr.mxu0 0.0
          %1885 = vmatpush1.msra.mxu0 0.0
          %1886 = vmatprep.subr.mxu0 0.0
          %1887 = vmatpush1.msra.mxu0 0.0
          %1888 = vmatprep.subr.mxu0 0.0
          %1889 = vmatpush1.msra.mxu0 0.0
          %1890 = vmatprep.subr.mxu0 0.0
          %1891 = vmatpush1.msra.mxu0 0.0
          %1892 = vmatprep.subr.mxu0 0.0
          %1893 = vmatpush1.msra.mxu0 0.0
          %1894 = vmatprep.subr.mxu0 0.0
          %1895 = vmatpush1.msra.mxu0 0.0
          %1896 = vmatprep.subr.mxu0 0.0
          %1897 = vmatpush1.msra.mxu0 0.0
          %1898 = vmatprep.subr.mxu0 0.0
          %1899 = vmatpush1.msra.mxu0 0.0
          %1900 = vmatprep.subr.mxu0 0.0
          %1901 = vmatpush1.msra.mxu0 0.0
          %1902 = vmatprep.subr.mxu0 0.0
          %1903 = vmatpush1.msra.mxu0 0.0
          %1904 = vmatprep.subr.mxu0 0.0
          %1905 = vmatpush1.msra.mxu0 0.0
          %1906 = vmatprep.mubr.f32.mxu0 0.0
          %1907 = vmatmul.mubr.f32.gmra.mrb[0].mxu0 %v1840
          %v1908 = vpop.f32.mrb[0].mxu0
          %v1909 = vadd.f32 %v1837, %v1908
          %v1910 = vpop.f32.mrb[0].mxu0
          %1911 = vdwg.mxu0
          %vm1912 = vcmask 23552
          %1913 = vst.msk [vmem:[%s868] sm:$0xff] %vm1912, %v1909
        $region116: #{tpu_custom_call.1} parent=99 // pred_fallthru
          _
        %p1914 = scmp.lt.s32.totalorder %s37, 1
        %s1915 = scalar_select %p1914, %s37, 1
        %s1916 = smul.addr %s1915, 8
        %s1917 = scalar_lea.vmem %s20, %s1916
        // Predicated region
        $region117: #{tpu_custom_call.1} parent=99 // pred_check
          %p1918 = pneg %p553
        $region118: #{tpu_custom_call.1} parent=99 // pred_check_branch
          %1920 = sbr.rel (%p1918) target = $region120
        $region119: #{tpu_custom_call.1} parent=99 // pred_region
          _
        $region120: #{tpu_custom_call.1} parent=99 // pred_fallthru
          _
      $region100: #{tpu_custom_call.1} parent=5 // pred_fallthru
        _
      %p1921 = scmp.le.s32.totalorder 2, %s28
      // Predicated region
      $region121: #{tpu_custom_call.1} parent=5 // pred_check
        %p1922 = pneg %p1921
      $region122: #{tpu_custom_call.1} parent=5 // pred_check_branch
        %1924 = sbr.rel (%p1922) target = $region124
      $region123: #{tpu_custom_call.1} parent=5 // pred_region
        %s1925 = ssub.s32 %s28, 2
        // Predicated region
        $region125: #{tpu_custom_call.1} parent=123 // pred_check
          %p1926 = pneg %p559
        $region126: #{tpu_custom_call.1} parent=123 // pred_check_branch
          %1928 = sbr.rel (%p1926) target = $region128
        $region127: #{tpu_custom_call.1} parent=123 // pred_region
          %p1929 = scmp.lt.s32.totalorder %s39, 1
          %s1930 = scalar_select %p1929, %s39, 1
          %s1931 = smul.addr %s1930, 8
          %s1932 = scalar_lea.vmem %s20, %s1931
        $region128: #{tpu_custom_call.1} parent=123 // pred_fallthru
          _
      $region124: #{tpu_custom_call.1} parent=5 // pred_fallthru
        _
    $region6: #{tpu_custom_call.1} parent=1 // loop_footer
      %s32 = sadd.s32 1, %s28
    $region7: #{tpu_custom_call.1} parent=1 // loop_footer_branch
      %27 = sbr.rel target = $region3
    $region8: #{tpu_custom_call.1} parent=1 // loop_exit
      _
    %1933 = vsyncpa [#allocation4], 1
    %s1934 = scalar_lea.sflag [#allocation4], 1
    %1935 = vsyncpa %s1934, 1
    %1936 = vsyncpa [#allocation6], 1

</llo_original>
